<compile_context>
chip_gen: v5e
topology: v5e:2x2
jax: 0.10.0
libtpu: 0.0.40
codegen_flags: <defaults>
</compile_context>

<pallas_src>
import functools

import jax
import jax.numpy as jnp
import numpy as np
from jax.experimental import pallas as pl
from jax.experimental.pallas import tpu as pltpu


def _round_up(x, m):
    return ((x + m - 1) // m) * m


# ---------------------------------------------------------------------------
# Fused kernel: im2col conv3x3 (+bias, ReLU) -> masked-matmul GAP -> fc (+bias)
# One grid step handles NB batch elements entirely in VMEM.
# ---------------------------------------------------------------------------
def _fused_conv_pool_fc_kernel(x_ref, wc_ref, bc_ref, pool_ref, wf_ref, bf_ref,
                               o_ref, *, tap_starts, lw, nb):
    # x_ref   : (NB, Lp, Cin)      f32  spatially zero-padded, flattened images
    # wc_ref  : (9*Cin, Cout_pad)  bf16 conv weights (im2col layout)
    # bc_ref  : (1, Cout_pad)      f32  conv bias
    # pool_ref: (NB, NB*Lw)        f32  valid-position selector * 1/(H*W)
    # wf_ref  : (Cout_pad, NC_pad) f32  fc weights
    # bf_ref  : (1, NC_pad)        f32  fc bias
    # o_ref   : (NB, 1, NC_pad)    f32  logits for this block of samples

    # Build the im2col patch matrix (NB*Lw, 9*Cin): 9 contiguous static windows
    # of each flattened padded image, concatenated along lanes. Single bf16 cast.
    pieces = []
    for b in range(nb):
        xb = x_ref[b]                                       # (Lp, Cin) f32
        taps = [xb[s:s + lw, :] for s in tap_starts]        # 9 x (Lw, Cin)
        pieces.append(jnp.concatenate(taps, axis=1))        # (Lw, 9*Cin)
    patches = pieces[0] if nb == 1 else jnp.concatenate(pieces, axis=0)
    patches = patches.astype(jnp.bfloat16)                  # hoisted single cast

    # conv3x3 as ONE matmul (K = 9*Cin), f32 accumulate; bias + ReLU on VPU.
    conv = jnp.dot(patches, wc_ref[...], preferred_element_type=jnp.float32)
    conv = jnp.maximum(conv + bc_ref[...], 0.0)              # (NB*Lw, Cout_pad)

    # Global average pool as a masked-weights matmul: selector rows hold
    # 1/(H*W) at valid spatial positions and 0 at the wrap-around columns.
    pooled = jnp.dot(pool_ref[...], conv,
                     preferred_element_type=jnp.float32)     # (NB, Cout_pad)

    logits = jnp.dot(pooled, wf_ref[...],
                     preferred_element_type=jnp.float32) + bf_ref[...]
    o_ref[...] = logits[:, None, :]                          # (NB, 1, NC_pad)


# ---------------------------------------------------------------------------
# Wrapper (forward pass of `network`)
# ---------------------------------------------------------------------------
def network_forward(x_nchw, params, *, numclass):
    N, Cin, H, W = map(int, x_nchw.shape)
    W2 = W + 2                        # row width of the spatially padded image
    Lw = H * W2                       # matmul rows per sample (2 invalid cols/row)
    Lp = (H + 3) * W2                 # padded+flattened length (covers every tap)

    wc, bc, wf, bf = params["wc"], params["bc"], params["wf"], params["bf"]
    k9cin, cout_pad = map(int, wc.shape)
    nc_pad = int(wf.shape[1])

    # Fold batch: NB samples per grid step; keep >= 2 grid steps when N >= 2 so
    # both v7x TensorCores get work ("parallel" grid axis / megacore).
    nb = min(max(1, (N + 1) // 2), 8)
    num_blocks = -(-N // nb)
    n_pad = num_blocks * nb

    # NCHW -> NHWC + 'same' spatial zero pad (1 top / 2 bottom / 1 left / 1 right)
    # so every 3x3 tap is a contiguous static window of the flattened image.
    # No per-tap masks and no HBM-materialized im2col.
    # TODO(synk): accepting NHWC input directly would drop this transpose.
    x_nhwc = jnp.transpose(x_nchw, (0, 2, 3, 1)).astype(jnp.float32)
    x_ext = jnp.pad(x_nhwc, ((0, n_pad - N), (1, 2), (1, 1), (0, 0))
                    ).reshape(n_pad, Lp, Cin)

    tap_starts = tuple(di * W2 + dj for di in range(3) for dj in range(3))

    # Valid-position selector for the pooling matmul; carries the 1/(H*W) mean
    # scale so no separate multiply is needed anywhere in the kernel.
    ii, jj = np.divmod(np.arange(Lw), W2)
    valid = ((ii < H) & (jj < W)).astype(np.float32) / float(H * W)
    pool_np = np.zeros((nb, nb * Lw), np.float32)
    for b in range(nb):
        pool_np[b, b * Lw:(b + 1) * Lw] = valid
    pool = jnp.asarray(pool_np)

    kernel = functools.partial(_fused_conv_pool_fc_kernel,
                               tap_starts=tap_starts, lw=Lw, nb=nb)

    flops = (2 * n_pad * Lw * k9cin * cout_pad        # conv matmul
             + 2 * n_pad * Lw * cout_pad              # pooling matmul
             + 2 * n_pad * cout_pad * nc_pad)         # fc matmul
    bytes_accessed = (x_ext.size * 4 + wc.size * 2 + bc.size * 4
                      + pool.size * 4 + wf.size * 4 + bf.size * 4
                      + n_pad * nc_pad * 4)

    out = pl.pallas_call(
        kernel,
        out_shape=jax.ShapeDtypeStruct((n_pad, 1, nc_pad), jnp.float32),
        grid=(num_blocks,),
        in_specs=[
            pl.BlockSpec((nb, Lp, Cin), lambda n: (n, 0, 0)),
            pl.BlockSpec((k9cin, cout_pad), lambda n: (0, 0)),
            pl.BlockSpec((1, cout_pad), lambda n: (0, 0)),
            pl.BlockSpec((nb, nb * Lw), lambda n: (0, 0)),
            pl.BlockSpec((cout_pad, nc_pad), lambda n: (0, 0)),
            pl.BlockSpec((1, nc_pad), lambda n: (0, 0)),
        ],
        out_specs=pl.BlockSpec((nb, 1, nc_pad), lambda n: (n, 0, 0)),
        compiler_params=pltpu.CompilerParams(
            dimension_semantics=("parallel",)),
        cost_estimate=pl.CostEstimate(flops=flops, transcendentals=0,
                                      bytes_accessed=bytes_accessed),
    )(x_ext, wc, bc, pool, wf, bf)

    return out[:N, 0, :numclass]


# ---------------------------------------------------------------------------
# Parameters (PyTorch layouts) + padded/bf16 kernel copies
# ---------------------------------------------------------------------------
def init_params(key, cin=4, cout=32, numclass=10):
    k1, k2, k3, k4 = jax.random.split(key, 4)
    conv_w = jax.random.normal(k1, (cout, cin, 3, 3), jnp.float32) * 0.1   # OIHW
    conv_b = jax.random.normal(k2, (cout,), jnp.float32) * 0.01
    fc_w = jax.random.normal(k3, (numclass, cout), jnp.float32) * 0.1      # [out,in]
    fc_b = jax.random.normal(k4, (numclass,), jnp.float32) * 0.01

    cout_pad = _round_up(cout, 128)
    nc_pad = _round_up(numclass, 128)

    # OIHW -> im2col (9*Cin, Cout), zero-padded to 128 lanes, bf16 for the MXU.
    w_mat = jnp.transpose(conv_w, (2, 3, 1, 0)).reshape(9 * cin, cout)
    wc = jnp.zeros((9 * cin, cout_pad), jnp.bfloat16)
    wc = wc.at[:, :cout].set(w_mat.astype(jnp.bfloat16))
    bc = jnp.zeros((1, cout_pad), jnp.float32).at[0, :cout].set(conv_b)
    wf = jnp.zeros((cout_pad, nc_pad), jnp.float32)
    wf = wf.at[:cout, :numclass].set(fc_w.T)
    bf = jnp.zeros((1, nc_pad), jnp.float32).at[0, :numclass].set(fc_b)

    params = {"wc": wc, "bc": bc, "wf": wf, "bf": bf}
    ref_params = {"conv_w_mat": w_mat, "conv_b": conv_b,
                  "fc_w": fc_w.T, "fc_b": fc_b}
    return params, ref_params


def _reference_forward(x_nchw, ref_params):
    """Pure-JAX f32 reference: conv3x3 'same' + bias + ReLU -> GAP -> fc."""
    N, Cin, H, W = x_nchw.shape
    x = jnp.transpose(x_nchw, (0, 2, 3, 1))
    xp = jnp.pad(x, ((0, 0), (1, 1), (1, 1), (0, 0)))
    taps = [xp[:, di:di + H, dj:dj + W, :] for di in range(3) for dj in range(3)]
    patches = jnp.stack(taps, axis=3).reshape(N * H * W, 9 * Cin)
    conv = jnp.maximum(patches @ ref_params["conv_w_mat"]
                       + ref_params["conv_b"][None, :], 0.0)
    feats = conv.reshape(N, H * W, -1).mean(axis=1)
    return feats @ ref_params["fc_w"] + ref_params["fc_b"][None, :]


if __name__ == "__main__":
    key = jax.random.PRNGKey(0)
    kx, kp = jax.random.split(key)

    N, Cin, H, W = 2, 4, 16, 16
    Cout, numclass = 32, 10
    x = jax.random.normal(kx, (N, Cin, H, W), jnp.float32)    # NCHW, like PyTorch

    params, ref_params = init_params(kp, cin=Cin, cout=Cout, numclass=numclass)

    fwd = jax.jit(functools.partial(network_forward, numclass=numclass))
    out = jax.block_until_ready(fwd(x, params))
    assert out.shape == (N, numclass), out.shape

    ref = _reference_forward(x, ref_params)
    # bf16 MXU operands for the conv matmul (f32 accumulate) => loosened tol.
    max_err = float(jnp.max(jnp.abs(out - ref)))
    assert jnp.allclose(out, ref, atol=2e-2, rtol=2e-2), max_err

    print("KERNEL_OK")
</pallas_src>

<mosaic_0001>
module attributes {stable_mosaic.version = 11 : i64} {
  func.func @_fused_conv_pool_fc_kernel(%arg0: i32, %arg1: memref<1x342x4xf32, #tpu.memory_space<vmem>>, %arg2: memref<36x128xbf16, #tpu.memory_space<vmem>>, %arg3: memref<1x128xf32, #tpu.memory_space<vmem>>, %arg4: memref<1x288xf32, #tpu.memory_space<vmem>>, %arg5: memref<128x128xf32, #tpu.memory_space<vmem>>, %arg6: memref<1x128xf32, #tpu.memory_space<vmem>>, %arg7: memref<1x1x128xf32, #tpu.memory_space<vmem>>) attributes {dimension_semantics = [#tpu.dimension_semantics<parallel>], iteration_bounds = array<i64: 2>, scalar_prefetch = 0 : i64, scratch_operands = 0 : i64, tpu.core_type = #tpu.core_type<tc>, window_params = [{transform_indices = @transform_0, window_bounds = array<i64: 1, 342, 4>}, {pipeline_mode = #tpu.pipeline_mode<synchronous>, transform_indices = @transform_1, window_bounds = array<i64: 36, 128>}, {pipeline_mode = #tpu.pipeline_mode<synchronous>, transform_indices = @transform_2, window_bounds = array<i64: 1, 128>}, {pipeline_mode = #tpu.pipeline_mode<synchronous>, transform_indices = @transform_3, window_bounds = array<i64: 1, 288>}, {pipeline_mode = #tpu.pipeline_mode<synchronous>, transform_indices = @transform_4, window_bounds = array<i64: 128, 128>}, {pipeline_mode = #tpu.pipeline_mode<synchronous>, transform_indices = @transform_5, window_bounds = array<i64: 1, 128>}, {transform_indices = @transform_6, window_bounds = array<i64: 1, 1, 128>}]} {
    %c0 = arith.constant 0 : index
    %c0_0 = arith.constant 0 : index
    %c0_1 = arith.constant 0 : index
    %0 = vector.load %arg1[%c0, %c0_0, %c0_1] : memref<1x342x4xf32, #tpu.memory_space<vmem>>, vector<1x342x4xf32>
    %1 = vector.shape_cast %0 : vector<1x342x4xf32> to vector<342x4xf32>
    %2 = vector.extract_strided_slice %1 {offsets = [0, 0], sizes = [288, 4], strides = [1, 1]} : vector<342x4xf32> to vector<288x4xf32>
    %3 = vector.extract_strided_slice %1 {offsets = [1, 0], sizes = [288, 4], strides = [1, 1]} : vector<342x4xf32> to vector<288x4xf32>
    %4 = vector.extract_strided_slice %1 {offsets = [2, 0], sizes = [288, 4], strides = [1, 1]} : vector<342x4xf32> to vector<288x4xf32>
    %5 = vector.extract_strided_slice %1 {offsets = [18, 0], sizes = [288, 4], strides = [1, 1]} : vector<342x4xf32> to vector<288x4xf32>
    %6 = vector.extract_strided_slice %1 {offsets = [19, 0], sizes = [288, 4], strides = [1, 1]} : vector<342x4xf32> to vector<288x4xf32>
    %7 = vector.extract_strided_slice %1 {offsets = [20, 0], sizes = [288, 4], strides = [1, 1]} : vector<342x4xf32> to vector<288x4xf32>
    %8 = vector.extract_strided_slice %1 {offsets = [36, 0], sizes = [288, 4], strides = [1, 1]} : vector<342x4xf32> to vector<288x4xf32>
    %9 = vector.extract_strided_slice %1 {offsets = [37, 0], sizes = [288, 4], strides = [1, 1]} : vector<342x4xf32> to vector<288x4xf32>
    %10 = vector.extract_strided_slice %1 {offsets = [38, 0], sizes = [288, 4], strides = [1, 1]} : vector<342x4xf32> to vector<288x4xf32>
    %11 = tpu.concatenate %2, %3, %4, %5, %6, %7, %8, %9, %10 in 1 : vector<288x4xf32>, vector<288x4xf32>, vector<288x4xf32>, vector<288x4xf32>, vector<288x4xf32>, vector<288x4xf32>, vector<288x4xf32>, vector<288x4xf32>, vector<288x4xf32> -> vector<288x36xf32>
    %12 = arith.truncf %11 : vector<288x36xf32> to vector<288x36xbf16>
    %c0_2 = arith.constant 0 : index
    %c0_3 = arith.constant 0 : index
    %13 = vector.load %arg2[%c0_2, %c0_3] : memref<36x128xbf16, #tpu.memory_space<vmem>>, vector<36x128xbf16>
    %cst = arith.constant dense<0.000000e+00> : vector<288x128xf32>
    %14 = tpu.matmul %12, %13, %cst {dimension_numbers = #tpu.dot_dimension_numbers<[1], [0], [0], [1], [0, 0, 1, 1], [], []>} : vector<288x36xbf16>, vector<36x128xbf16>, vector<288x128xf32> -> vector<288x128xf32>
    %c0_4 = arith.constant 0 : index
    %c0_5 = arith.constant 0 : index
    %15 = vector.load %arg3[%c0_4, %c0_5] : memref<1x128xf32, #tpu.memory_space<vmem>>, vector<1x128xf32>
    %16 = vector.broadcast %15 : vector<1x128xf32> to vector<288x128xf32>
    %17 = arith.addf %14, %16 : vector<288x128xf32>
    %cst_6 = arith.constant 0.000000e+00 : f32
    %18 = vector.broadcast %cst_6 : f32 to vector<288x128xf32>
    %19 = arith.maximumf %17, %18 : vector<288x128xf32>
    %c0_7 = arith.constant 0 : index
    %c0_8 = arith.constant 0 : index
    %20 = vector.load %arg4[%c0_7, %c0_8] : memref<1x288xf32, #tpu.memory_space<vmem>>, vector<1x288xf32>
    %cst_9 = arith.constant dense<0.000000e+00> : vector<1x128xf32>
    %21 = tpu.matmul %20, %19, %cst_9 {dimension_numbers = #tpu.dot_dimension_numbers<[1], [0], [0], [1], [0, 0, 1, 1], [], []>} : vector<1x288xf32>, vector<288x128xf32>, vector<1x128xf32> -> vector<1x128xf32>
    %c0_10 = arith.constant 0 : index
    %c0_11 = arith.constant 0 : index
    %22 = vector.load %arg5[%c0_10, %c0_11] : memref<128x128xf32, #tpu.memory_space<vmem>>, vector<128x128xf32>
    %cst_12 = arith.constant dense<0.000000e+00> : vector<1x128xf32>
    %23 = tpu.matmul %21, %22, %cst_12 {dimension_numbers = #tpu.dot_dimension_numbers<[1], [0], [0], [1], [0, 0, 1, 1], [], []>} : vector<1x128xf32>, vector<128x128xf32>, vector<1x128xf32> -> vector<1x128xf32>
    %c0_13 = arith.constant 0 : index
    %c0_14 = arith.constant 0 : index
    %24 = vector.load %arg6[%c0_13, %c0_14] : memref<1x128xf32, #tpu.memory_space<vmem>>, vector<1x128xf32>
    %25 = arith.addf %23, %24 : vector<1x128xf32>
    %26 = vector.shape_cast %25 : vector<1x128xf32> to vector<1x1x128xf32>
    %c0_15 = arith.constant 0 : index
    %c0_16 = arith.constant 0 : index
    %c0_17 = arith.constant 0 : index
    %27 = vector.load %arg7[%c0_15, %c0_16, %c0_17] : memref<1x1x128xf32, #tpu.memory_space<vmem>>, vector<1x1x128xf32>
    tpu.vector_store %arg7[%c0_15, %c0_16, %c0_17], %26 {strides = array<i32>} : memref<1x1x128xf32, #tpu.memory_space<vmem>>, vector<1x1x128xf32>,
    return
  }
  func.func @transform_0(%arg0: i32) -> (i32, i32, i32) {
    %c0_i32 = arith.constant 0 : i32
    %c0_i32_0 = arith.constant 0 : i32
    %c0_i32_1 = arith.constant 0 : i32
    return %arg0, %c0_i32, %c0_i32_0 : i32, i32, i32
  }
  func.func @transform_1(%arg0: i32) -> (i32, i32) {
    %c0_i32 = arith.constant 0 : i32
    %c0_i32_0 = arith.constant 0 : i32
    %c0_i32_1 = arith.constant 0 : i32
    return %c0_i32, %c0_i32_0 : i32, i32
  }
  func.func @transform_2(%arg0: i32) -> (i32, i32) {
    %c0_i32 = arith.constant 0 : i32
    %c0_i32_0 = arith.constant 0 : i32
    %c0_i32_1 = arith.constant 0 : i32
    return %c0_i32, %c0_i32_0 : i32, i32
  }
  func.func @transform_3(%arg0: i32) -> (i32, i32) {
    %c0_i32 = arith.constant 0 : i32
    %c0_i32_0 = arith.constant 0 : i32
    %c0_i32_1 = arith.constant 0 : i32
    return %c0_i32, %c0_i32_0 : i32, i32
  }
  func.func @transform_4(%arg0: i32) -> (i32, i32) {
    %c0_i32 = arith.constant 0 : i32
    %c0_i32_0 = arith.constant 0 : i32
    %c0_i32_1 = arith.constant 0 : i32
    return %c0_i32, %c0_i32_0 : i32, i32
  }
  func.func @transform_5(%arg0: i32) -> (i32, i32) {
    %c0_i32 = arith.constant 0 : i32
    %c0_i32_0 = arith.constant 0 : i32
    %c0_i32_1 = arith.constant 0 : i32
    return %c0_i32, %c0_i32_0 : i32, i32
  }
  func.func @transform_6(%arg0: i32) -> (i32, i32, i32) {
    %c0_i32 = arith.constant 0 : i32
    %c0_i32_0 = arith.constant 0 : i32
    %c0_i32_1 = arith.constant 0 : i32
    return %arg0, %c0_i32, %c0_i32_0 : i32, i32, i32
  }
}

</mosaic_0001>

<llo_original>
// kernel: network_forward.1
$region0: #{network_forward.1}
  #allocation0 [shape = 'u32[]', space=smem, size = 0x4, offset = 0x4, fixed_abs, tag = 'smem constant byte address 0x4 - core index']
  #allocation1 [shape = 'u32[72,128]{1,0:T(1,128)}', space=vmem, size = 0x9000, scoped, tag = 'internal scratch']
  %s0 = inlined_call_operand.vmem [shape: f32[2,342,4], index: 0, kind: input, shape index: {}]
  %s1 = inlined_call_operand.vmem [shape: bf16[36,128], index: 1, kind: input, shape index: {}]
  %s2 = inlined_call_operand.vmem [shape: f32[1,128], index: 2, kind: input, shape index: {}]
  %s3 = inlined_call_operand.vmem [shape: f32[1,288], index: 3, kind: input, shape index: {}]
  %s4 = inlined_call_operand.vmem [shape: f32[128,128], index: 4, kind: input, shape index: {}]
  %s5 = inlined_call_operand.vmem [shape: f32[1,128], index: 5, kind: input, shape index: {}]
  %s6 = inlined_call_operand.hbm [shape: f32[2,1,128], index: 6, kind: output, shape index: {}]
  %s7 = sld [smem:[#allocation0]]
  $region57: #{network_forward.1} parent=0
    _
  %s9 = ssub.s32 1, %s7
  %s10 = scalar_select 0, %s9, %s7
  $region1: #{network_forward.1} parent=0
    #allocation2 [shape = 'u8[1024]{0}', space=vmem, size = 0x400, scoped, tag = 'output window, operand 0']
    #allocation3 [shape = 's32[2]{0}', space=sflag, size = 0x8, scoped, tag = 'scoped memory for network_forward.1']
    %11 = vsyncpa [#allocation3], 0
    %s12 = scalar_lea.sflag [#allocation3], 1
    %13 = vsyncpa %s12, 0
    loop: start=0, step=1, limit=4
    $region2: #{network_forward.1} parent=1 // loop_pre_header
      _
    $region3: #{network_forward.1} parent=1 // loop_header
      %s15 = sphi 0, %s19
      %p16 = scmp.ge.s32.totalorder %s15, 4
      %s25 = sphi 0, %s27
      %s28 = sphi 0, %s25
      %s29 = sphi 0, %s28
      %s45 = sphi 0, %s29
      %s49 = sphi 0, %s49
      %s51 = sphi 0, %s49
      %s52 = sphi 0, %s51
      %s66 = sphi 0, %s52
      %s70 = sphi 0, %s70
      %s72 = sphi 0, %s70
      %s73 = sphi 0, %s72
      %s87 = sphi 0, %s73
      %s91 = sphi 0, %s91
      %s93 = sphi 0, %s91
      %s94 = sphi 0, %s93
      %s108 = sphi 0, %s94
      %s112 = sphi 0, %s112
      %s114 = sphi 0, %s112
      %s115 = sphi 0, %s114
      %s129 = sphi 0, %s115
      %s133 = sphi 0, %s133
      %s135 = sphi 0, %s133
      %s136 = sphi 0, %s135
      %s150 = sphi 0, %s136
      %s156 = sphi 0, %s158
      %s159 = sphi 0, %s156
      %s160 = sphi 0, %s159
      %s176 = sphi 0, %s160
    $region4: #{network_forward.1} parent=1 // loop_header_branch
      %18 = sbr.rel (%p16) target = $region8
    $region5: #{network_forward.1} parent=1 // loop_body
      %s20 = ssub.s32 %s15, 1
      %s21 = ssub.s32 %s15, 2
      %s22 = sadd.s32 %s15, 1
      %s23 = ssub.s32 %s15, %s22
      %p24 = scmp.eq.s32.totalorder %s23, 0
      %s26 = sadd.s32 %s25, 1
      %s27 = scalar_select %p24, %s25, %s26
      %p30 = pneg %p24
      %p31 = scmp.eq.s32.totalorder %s15, 1
      %p32 = por %p30, %p31
      %p33 = scmp.ne.s32.totalorder %s25, %s28
      %p34 = scmp.eq.s32.totalorder %s15, 0
      %p35 = por %p33, %p34
      %p36 = scmp.ne.s32.totalorder %s25, %s28
      %p37 = scmp.eq.s32.totalorder %s20, 1
      %p38 = por %p36, %p37
      %p39 = scmp.ne.s32.totalorder %s28, %s29
      %p40 = scmp.eq.s32.totalorder %s20, 0
      %p41 = por %p39, %p40
      %p42 = scmp.ne.s32.totalorder %s28, %s29
      %p43 = scmp.eq.s32.totalorder %s21, 1
      %p44 = por %p42, %p43
      %p46 = scmp.ne.s32.totalorder %s29, %s45
      %p47 = scmp.eq.s32.totalorder %s21, 0
      %p48 = por %p46, %p47
      %s50 = sadd.s32 %s49, 1
      %p53 = scmp.eq.s32.totalorder %s15, 1
      %p54 = scmp.ne.s32.totalorder %s49, %s51
      %p55 = scmp.eq.s32.totalorder %s15, 0
      %p56 = por %p54, %p55
      %p57 = scmp.ne.s32.totalorder %s49, %s51
      %p58 = scmp.eq.s32.totalorder %s20, 1
      %p59 = por %p57, %p58
      %p60 = scmp.ne.s32.totalorder %s51, %s52
      %p61 = scmp.eq.s32.totalorder %s20, 0
      %p62 = por %p60, %p61
      %p63 = scmp.ne.s32.totalorder %s51, %s52
      %p64 = scmp.eq.s32.totalorder %s21, 1
      %p65 = por %p63, %p64
      %p67 = scmp.ne.s32.totalorder %s52, %s66
      %p68 = scmp.eq.s32.totalorder %s21, 0
      %p69 = por %p67, %p68
      %s71 = sadd.s32 %s70, 1
      %p74 = scmp.eq.s32.totalorder %s15, 1
      %p75 = scmp.ne.s32.totalorder %s70, %s72
      %p76 = scmp.eq.s32.totalorder %s15, 0
      %p77 = por %p75, %p76
      %p78 = scmp.ne.s32.totalorder %s70, %s72
      %p79 = scmp.eq.s32.totalorder %s20, 1
      %p80 = por %p78, %p79
      %p81 = scmp.ne.s32.totalorder %s72, %s73
      %p82 = scmp.eq.s32.totalorder %s20, 0
      %p83 = por %p81, %p82
      %p84 = scmp.ne.s32.totalorder %s72, %s73
      %p85 = scmp.eq.s32.totalorder %s21, 1
      %p86 = por %p84, %p85
      %p88 = scmp.ne.s32.totalorder %s73, %s87
      %p89 = scmp.eq.s32.totalorder %s21, 0
      %p90 = por %p88, %p89
      %s92 = sadd.s32 %s91, 1
      %p95 = scmp.eq.s32.totalorder %s15, 1
      %p96 = scmp.ne.s32.totalorder %s91, %s93
      %p97 = scmp.eq.s32.totalorder %s15, 0
      %p98 = por %p96, %p97
      %p99 = scmp.ne.s32.totalorder %s91, %s93
      %p100 = scmp.eq.s32.totalorder %s20, 1
      %p101 = por %p99, %p100
      %p102 = scmp.ne.s32.totalorder %s93, %s94
      %p103 = scmp.eq.s32.totalorder %s20, 0
      %p104 = por %p102, %p103
      %p105 = scmp.ne.s32.totalorder %s93, %s94
      %p106 = scmp.eq.s32.totalorder %s21, 1
      %p107 = por %p105, %p106
      %p109 = scmp.ne.s32.totalorder %s94, %s108
      %p110 = scmp.eq.s32.totalorder %s21, 0
      %p111 = por %p109, %p110
      %s113 = sadd.s32 %s112, 1
      %p116 = scmp.eq.s32.totalorder %s15, 1
      %p117 = scmp.ne.s32.totalorder %s112, %s114
      %p118 = scmp.eq.s32.totalorder %s15, 0
      %p119 = por %p117, %p118
      %p120 = scmp.ne.s32.totalorder %s112, %s114
      %p121 = scmp.eq.s32.totalorder %s20, 1
      %p122 = por %p120, %p121
      %p123 = scmp.ne.s32.totalorder %s114, %s115
      %p124 = scmp.eq.s32.totalorder %s20, 0
      %p125 = por %p123, %p124
      %p126 = scmp.ne.s32.totalorder %s114, %s115
      %p127 = scmp.eq.s32.totalorder %s21, 1
      %p128 = por %p126, %p127
      %p130 = scmp.ne.s32.totalorder %s115, %s129
      %p131 = scmp.eq.s32.totalorder %s21, 0
      %p132 = por %p130, %p131
      %s134 = sadd.s32 %s133, 1
      %p137 = scmp.eq.s32.totalorder %s15, 1
      %p138 = scmp.ne.s32.totalorder %s133, %s135
      %p139 = scmp.eq.s32.totalorder %s15, 0
      %p140 = por %p138, %p139
      %p141 = scmp.ne.s32.totalorder %s133, %s135
      %p142 = scmp.eq.s32.totalorder %s20, 1
      %p143 = por %p141, %p142
      %p144 = scmp.ne.s32.totalorder %s135, %s136
      %p145 = scmp.eq.s32.totalorder %s20, 0
      %p146 = por %p144, %p145
      %p147 = scmp.ne.s32.totalorder %s135, %s136
      %p148 = scmp.eq.s32.totalorder %s21, 1
      %p149 = por %p147, %p148
      %p151 = scmp.ne.s32.totalorder %s136, %s150
      %p152 = scmp.eq.s32.totalorder %s21, 0
      %p153 = por %p151, %p152
      %s154 = ssub.s32 %s15, %s22
      %p155 = scmp.eq.s32.totalorder %s154, 0
      %s157 = sadd.s32 %s156, 1
      %s158 = scalar_select %p155, %s156, %s157
      %p161 = pneg %p155
      %p162 = scmp.eq.s32.totalorder %s15, 1
      %p163 = por %p161, %p162
      %p164 = scmp.ne.s32.totalorder %s156, %s159
      %p165 = scmp.eq.s32.totalorder %s15, 0
      %p166 = por %p164, %p165
      %p167 = scmp.ne.s32.totalorder %s156, %s159
      %p168 = scmp.eq.s32.totalorder %s20, 1
      %p169 = por %p167, %p168
      %p170 = scmp.ne.s32.totalorder %s159, %s160
      %p171 = scmp.eq.s32.totalorder %s20, 0
      %p172 = por %p170, %p171
      %p173 = scmp.ne.s32.totalorder %s159, %s160
      %p174 = scmp.eq.s32.totalorder %s21, 1
      %p175 = por %p173, %p174
      %p177 = scmp.ne.s32.totalorder %s160, %s176
      %p178 = scmp.eq.s32.totalorder %s21, 0
      %p179 = por %p177, %p178
      %p180 = scmp.le.s32.totalorder 1, %s15
      %p181 = scmp.lt.s32.totalorder %s15, 3
      %p182 = pnand %p180, %p181
      %p183 = pneg %p182
      // Predicated region
      $region9: #{network_forward.1} parent=5 // pred_check
        _
      $region10: #{network_forward.1} parent=5 // pred_check_branch
        %185 = sbr.rel (%p182) target = $region12
      $region11: #{network_forward.1} parent=5 // pred_region
        %s186 = ssub.s32 %s15, 1
        // Predicated region
        $region13: #{network_forward.1} parent=11 // pred_check
          %p187 = pneg %p62
        $region14: #{network_forward.1} parent=11 // pred_check_branch
          %189 = sbr.rel (%p187) target = $region16
        $region15: #{network_forward.1} parent=11 // pred_region
          _
        $region16: #{network_forward.1} parent=11 // pred_fallthru
          _
        // Predicated region
        $region17: #{network_forward.1} parent=11 // pred_check
          %p190 = pneg %p83
        $region18: #{network_forward.1} parent=11 // pred_check_branch
          %192 = sbr.rel (%p190) target = $region20
        $region19: #{network_forward.1} parent=11 // pred_region
          _
        $region20: #{network_forward.1} parent=11 // pred_fallthru
          _
        // Predicated region
        $region21: #{network_forward.1} parent=11 // pred_check
          %p193 = pneg %p104
        $region22: #{network_forward.1} parent=11 // pred_check_branch
          %195 = sbr.rel (%p193) target = $region24
        $region23: #{network_forward.1} parent=11 // pred_region
          _
        $region24: #{network_forward.1} parent=11 // pred_fallthru
          _
        // Predicated region
        $region25: #{network_forward.1} parent=11 // pred_check
          %p196 = pneg %p125
        $region26: #{network_forward.1} parent=11 // pred_check_branch
          %198 = sbr.rel (%p196) target = $region28
        $region27: #{network_forward.1} parent=11 // pred_region
          _
        $region28: #{network_forward.1} parent=11 // pred_fallthru
          _
        // Predicated region
        $region29: #{network_forward.1} parent=11 // pred_check
          %p199 = pneg %p146
        $region30: #{network_forward.1} parent=11 // pred_check_branch
          %201 = sbr.rel (%p199) target = $region32
        $region31: #{network_forward.1} parent=11 // pred_region
          _
        $region32: #{network_forward.1} parent=11 // pred_fallthru
          _
      $region12: #{network_forward.1} parent=5 // pred_fallthru
        _
      %p202 = scmp.lt.s32.totalorder %s15, 2
      // Predicated region
      $region33: #{network_forward.1} parent=5 // pred_check
        %p203 = pneg %p202
      $region34: #{network_forward.1} parent=5 // pred_check_branch
        %205 = sbr.rel (%p203) target = $region36
      $region35: #{network_forward.1} parent=5 // pred_region
        // Predicated region
        $region37: #{network_forward.1} parent=35 // pred_check
          %p206 = pneg %p35
        $region38: #{network_forward.1} parent=35 // pred_check_branch
          %208 = sbr.rel (%p206) target = $region40
        $region39: #{network_forward.1} parent=35 // pred_region
          %p209 = scmp.lt.s32.totalorder %s15, 1
          %s210 = scalar_select %p209, %s15, 1
          %s211 = smul.addr %s210, 43
          %s212 = smul.addr %s211, 8
          %s213 = scalar_lea.vmem %s0, %s212
        $region40: #{network_forward.1} parent=35 // pred_fallthru
          _
      $region36: #{network_forward.1} parent=5 // pred_fallthru
        _
      %p214 = scmp.le.s32.totalorder 1, %s15
      %p215 = scmp.lt.s32.totalorder %s15, 3
      %p216 = pnand %p214, %p215
      %p217 = pneg %p216
      // Predicated region
      $region41: #{network_forward.1} parent=5 // pred_check
        _
      $region42: #{network_forward.1} parent=5 // pred_check_branch
        %219 = sbr.rel (%p216) target = $region44
      $region43: #{network_forward.1} parent=5 // pred_region
        %s220 = ssub.s32 %s15, 1
        %p221 = scmp.lt.s32.totalorder %s20, 1
        %s222 = scalar_select %p221, %s20, 1
        %s223 = smul.addr %s222, 43
        %s224 = smul.addr %s223, 8
        %s225 = scalar_lea.vmem %s0, %s224
        %p226 = pneg %p41
        %p227 = pneg %p38
        %p228 = pneg %p62
        %p229 = pneg %p59
        %p230 = pneg %p83
        %p231 = pneg %p80
        %p232 = pneg %p104
        %p233 = pneg %p101
        %p234 = pneg %p125
        %p235 = pneg %p122
        %p236 = pneg %p146
        %p237 = pneg %p143
        %p238 = pneg %p172
        %p239 = pneg %p169
        %s240 = sand.u32 %s159, 1
        %s241 = scalar_lea.sflag [#allocation3], %s240
        %s242 = sand.u32 %s159, 1
        %s243 = scalar_lea.vmem [#allocation2], %s242
        %p244 = scmp.lt.s32.totalorder %s20, 1
        %s245 = scalar_select %p244, %s20, 1
        %s246 = smul.addr %s245, 43
        %s247 = smul.addr %s246, 8
        %s248 = scalar_lea.vmem %s0, %s247
        %v250 = vld [vmem:[%s248] sm:$0xff]
        %v251 = vld [vmem:[%s248 + $0x8] sm:$0xff]
        %v252 = vld [vmem:[%s248 + $0x10] sm:$0xff]
        %v253 = vld [vmem:[%s248 + $0x18] sm:$0xff]
        %v254 = vld [vmem:[%s248 + $0x20] sm:$0xff]
        %v255 = vld [vmem:[%s248 + $0x28] sm:$0xff]
        %v256 = vld [vmem:[%s248 + $0x30] sm:$0xff]
        %v257 = vld [vmem:[%s248 + $0x38] sm:$0xff]
        %v258 = vld [vmem:[%s248 + $0x40] sm:$0xff]
        %v259 = vld [vmem:[%s248 + $0x48] sm:$0xff]
        %v260 = vld [vmem:[%s248 + $0x50] sm:$0xff]
        %v261 = vld [vmem:[%s248 + $0x58] sm:$0xff]
        %v262 = vld [vmem:[%s248 + $0x60] sm:$0xff]
        %v263 = vld [vmem:[%s248 + $0x68] sm:$0xff]
        %v264 = vld [vmem:[%s248 + $0x70] sm:$0xff]
        %v265 = vld [vmem:[%s248 + $0x78] sm:$0xff]
        %v266 = vld [vmem:[%s248 + $0x80] sm:$0xff]
        %v267 = vld [vmem:[%s248 + $0x88] sm:$0xff]
        %v268 = vld [vmem:[%s248 + $0x90] sm:$0xff]
        %v269 = vld [vmem:[%s248 + $0x98] sm:$0xff]
        %v270 = vld [vmem:[%s248 + $0xa0] sm:$0xff]
        %v271 = vld [vmem:[%s248 + $0xa8] sm:$0xff]
        %v272 = vld [vmem:[%s248 + $0xb0] sm:$0xff]
        %v273 = vld [vmem:[%s248 + $0xb8] sm:$0xff]
        %v274 = vld [vmem:[%s248 + $0xc0] sm:$0xff]
        %v275 = vld [vmem:[%s248 + $0xc8] sm:$0xff]
        %v276 = vld [vmem:[%s248 + $0xd0] sm:$0xff]
        %v277 = vld [vmem:[%s248 + $0xd8] sm:$0xff]
        %v278 = vld [vmem:[%s248 + $0xe0] sm:$0xff]
        %v279 = vld [vmem:[%s248 + $0xe8] sm:$0xff]
        %v280 = vld [vmem:[%s248 + $0xf0] sm:$0xff]
        %v281 = vld [vmem:[%s248 + $0xf8] sm:$0xff]
        %v282 = vld [vmem:[%s248 + $0x100] sm:$0xff]
        %v283 = vld [vmem:[%s248 + $0x108] sm:$0xff]
        %v284 = vld [vmem:[%s248 + $0x110] sm:$0xff]
        %v285 = vld [vmem:[%s248 + $0x118] sm:$0xff]
        %v286 = vld [vmem:[%s248 + $0x120] sm:$0xff]
        %v287 = vld [vmem:[%s248 + $0x128] sm:$0xff]
        %v288 = vld [vmem:[%s248 + $0x130] sm:$0xff]
        %v289 = vld [vmem:[%s248 + $0x138] sm:$0xff]
        %v290 = vld [vmem:[%s248 + $0x140] sm:$0xff]
        %vm328 = vcmask 1046528
        %v329 = vrot.slane %v250, 1
        %v330 = vrot.slane %v251, 1
        %v331 = vsel %vm328, %v329, %v330
        %v332 = vrot.slane %v252, 1
        %v333 = vsel %vm328, %v330, %v332
        %v334 = vrot.slane %v253, 1
        %v335 = vsel %vm328, %v332, %v334
        %v336 = vrot.slane %v254, 1
        %v337 = vsel %vm328, %v334, %v336
        %v338 = vrot.slane %v255, 1
        %v339 = vsel %vm328, %v336, %v338
        %v340 = vrot.slane %v256, 1
        %v341 = vsel %vm328, %v338, %v340
        %v342 = vrot.slane %v257, 1
        %v343 = vsel %vm328, %v340, %v342
        %v344 = vrot.slane %v258, 1
        %v345 = vsel %vm328, %v342, %v344
        %v346 = vrot.slane %v259, 1
        %v347 = vsel %vm328, %v344, %v346
        %v348 = vrot.slane %v260, 1
        %v349 = vsel %vm328, %v346, %v348
        %v350 = vrot.slane %v261, 1
        %v351 = vsel %vm328, %v348, %v350
        %v352 = vrot.slane %v262, 1
        %v353 = vsel %vm328, %v350, %v352
        %v354 = vrot.slane %v263, 1
        %v355 = vsel %vm328, %v352, %v354
        %v356 = vrot.slane %v264, 1
        %v357 = vsel %vm328, %v354, %v356
        %v358 = vrot.slane %v265, 1
        %v359 = vsel %vm328, %v356, %v358
        %v360 = vrot.slane %v266, 1
        %v361 = vsel %vm328, %v358, %v360
        %v362 = vrot.slane %v267, 1
        %v363 = vsel %vm328, %v360, %v362
        %v364 = vrot.slane %v268, 1
        %v365 = vsel %vm328, %v362, %v364
        %v366 = vrot.slane %v269, 1
        %v367 = vsel %vm328, %v364, %v366
        %v368 = vrot.slane %v270, 1
        %v369 = vsel %vm328, %v366, %v368
        %v370 = vrot.slane %v271, 1
        %v371 = vsel %vm328, %v368, %v370
        %v372 = vrot.slane %v272, 1
        %v373 = vsel %vm328, %v370, %v372
        %v374 = vrot.slane %v273, 1
        %v375 = vsel %vm328, %v372, %v374
        %v376 = vrot.slane %v274, 1
        %v377 = vsel %vm328, %v374, %v376
        %v378 = vrot.slane %v275, 1
        %v379 = vsel %vm328, %v376, %v378
        %v380 = vrot.slane %v276, 1
        %v381 = vsel %vm328, %v378, %v380
        %v382 = vrot.slane %v277, 1
        %v383 = vsel %vm328, %v380, %v382
        %v384 = vrot.slane %v278, 1
        %v385 = vsel %vm328, %v382, %v384
        %v386 = vrot.slane %v279, 1
        %v387 = vsel %vm328, %v384, %v386
        %v388 = vrot.slane %v280, 1
        %v389 = vsel %vm328, %v386, %v388
        %v390 = vrot.slane %v281, 1
        %v391 = vsel %vm328, %v388, %v390
        %v392 = vrot.slane %v282, 1
        %v393 = vsel %vm328, %v390, %v392
        %v394 = vrot.slane %v283, 1
        %v395 = vsel %vm328, %v392, %v394
        %v396 = vrot.slane %v284, 1
        %v397 = vsel %vm328, %v394, %v396
        %v398 = vrot.slane %v285, 1
        %v399 = vsel %vm328, %v396, %v398
        %v400 = vrot.slane %v286, 1
        %v401 = vsel %vm328, %v398, %v400
        %402 = vrot.lane.b32.xlu0 %v331, 4
        %v403 = vpop.permute.xlu0 %402
        %404 = vrot.lane.b32.xlu0 %v333, 4
        %v405 = vpop.permute.xlu0 %404
        %406 = vrot.lane.b32.xlu0 %v335, 4
        %v407 = vpop.permute.xlu0 %406
        %408 = vrot.lane.b32.xlu0 %v337, 4
        %v409 = vpop.permute.xlu0 %408
        %410 = vrot.lane.b32.xlu0 %v339, 4
        %v411 = vpop.permute.xlu0 %410
        %412 = vrot.lane.b32.xlu0 %v341, 4
        %v413 = vpop.permute.xlu0 %412
        %414 = vrot.lane.b32.xlu0 %v343, 4
        %v415 = vpop.permute.xlu0 %414
        %416 = vrot.lane.b32.xlu0 %v345, 4
        %v417 = vpop.permute.xlu0 %416
        %418 = vrot.lane.b32.xlu0 %v347, 4
        %v419 = vpop.permute.xlu0 %418
        %420 = vrot.lane.b32.xlu0 %v349, 4
        %v421 = vpop.permute.xlu0 %420
        %422 = vrot.lane.b32.xlu0 %v351, 4
        %v423 = vpop.permute.xlu0 %422
        %424 = vrot.lane.b32.xlu0 %v353, 4
        %v425 = vpop.permute.xlu0 %424
        %426 = vrot.lane.b32.xlu0 %v355, 4
        %v427 = vpop.permute.xlu0 %426
        %428 = vrot.lane.b32.xlu0 %v357, 4
        %v429 = vpop.permute.xlu0 %428
        %430 = vrot.lane.b32.xlu0 %v359, 4
        %v431 = vpop.permute.xlu0 %430
        %432 = vrot.lane.b32.xlu0 %v361, 4
        %v433 = vpop.permute.xlu0 %432
        %434 = vrot.lane.b32.xlu0 %v363, 4
        %v435 = vpop.permute.xlu0 %434
        %436 = vrot.lane.b32.xlu0 %v365, 4
        %v437 = vpop.permute.xlu0 %436
        %438 = vrot.lane.b32.xlu0 %v367, 4
        %v439 = vpop.permute.xlu0 %438
        %440 = vrot.lane.b32.xlu0 %v369, 4
        %v441 = vpop.permute.xlu0 %440
        %442 = vrot.lane.b32.xlu0 %v371, 4
        %v443 = vpop.permute.xlu0 %442
        %444 = vrot.lane.b32.xlu0 %v373, 4
        %v445 = vpop.permute.xlu0 %444
        %446 = vrot.lane.b32.xlu0 %v375, 4
        %v447 = vpop.permute.xlu0 %446
        %448 = vrot.lane.b32.xlu0 %v377, 4
        %v449 = vpop.permute.xlu0 %448
        %450 = vrot.lane.b32.xlu0 %v379, 4
        %v451 = vpop.permute.xlu0 %450
        %452 = vrot.lane.b32.xlu0 %v381, 4
        %v453 = vpop.permute.xlu0 %452
        %454 = vrot.lane.b32.xlu0 %v383, 4
        %v455 = vpop.permute.xlu0 %454
        %456 = vrot.lane.b32.xlu0 %v385, 4
        %v457 = vpop.permute.xlu0 %456
        %458 = vrot.lane.b32.xlu0 %v387, 4
        %v459 = vpop.permute.xlu0 %458
        %460 = vrot.lane.b32.xlu0 %v389, 4
        %v461 = vpop.permute.xlu0 %460
        %462 = vrot.lane.b32.xlu0 %v391, 4
        %v463 = vpop.permute.xlu0 %462
        %464 = vrot.lane.b32.xlu0 %v393, 4
        %v465 = vpop.permute.xlu0 %464
        %466 = vrot.lane.b32.xlu0 %v395, 4
        %v467 = vpop.permute.xlu0 %466
        %468 = vrot.lane.b32.xlu0 %v397, 4
        %v469 = vpop.permute.xlu0 %468
        %470 = vrot.lane.b32.xlu0 %v399, 4
        %v471 = vpop.permute.xlu0 %470
        %472 = vrot.lane.b32.xlu0 %v401, 4
        %v473 = vpop.permute.xlu0 %472
        %vm510 = vcmask 1045504
        %v511 = vrot.slane %v250, 2
        %v512 = vrot.slane %v251, 2
        %v513 = vsel %vm510, %v511, %v512
        %v514 = vrot.slane %v252, 2
        %v515 = vsel %vm510, %v512, %v514
        %v516 = vrot.slane %v253, 2
        %v517 = vsel %vm510, %v514, %v516
        %v518 = vrot.slane %v254, 2
        %v519 = vsel %vm510, %v516, %v518
        %v520 = vrot.slane %v255, 2
        %v521 = vsel %vm510, %v518, %v520
        %v522 = vrot.slane %v256, 2
        %v523 = vsel %vm510, %v520, %v522
        %v524 = vrot.slane %v257, 2
        %v525 = vsel %vm510, %v522, %v524
        %v526 = vrot.slane %v258, 2
        %v527 = vsel %vm510, %v524, %v526
        %v528 = vrot.slane %v259, 2
        %v529 = vsel %vm510, %v526, %v528
        %v530 = vrot.slane %v260, 2
        %v531 = vsel %vm510, %v528, %v530
        %v532 = vrot.slane %v261, 2
        %v533 = vsel %vm510, %v530, %v532
        %v534 = vrot.slane %v262, 2
        %v535 = vsel %vm510, %v532, %v534
        %v536 = vrot.slane %v263, 2
        %v537 = vsel %vm510, %v534, %v536
        %v538 = vrot.slane %v264, 2
        %v539 = vsel %vm510, %v536, %v538
        %v540 = vrot.slane %v265, 2
        %v541 = vsel %vm510, %v538, %v540
        %v542 = vrot.slane %v266, 2
        %v543 = vsel %vm510, %v540, %v542
        %v544 = vrot.slane %v267, 2
        %v545 = vsel %vm510, %v542, %v544
        %v546 = vrot.slane %v268, 2
        %v547 = vsel %vm510, %v544, %v546
        %v548 = vrot.slane %v269, 2
        %v549 = vsel %vm510, %v546, %v548
        %v550 = vrot.slane %v270, 2
        %v551 = vsel %vm510, %v548, %v550
        %v552 = vrot.slane %v271, 2
        %v553 = vsel %vm510, %v550, %v552
        %v554 = vrot.slane %v272, 2
        %v555 = vsel %vm510, %v552, %v554
        %v556 = vrot.slane %v273, 2
        %v557 = vsel %vm510, %v554, %v556
        %v558 = vrot.slane %v274, 2
        %v559 = vsel %vm510, %v556, %v558
        %v560 = vrot.slane %v275, 2
        %v561 = vsel %vm510, %v558, %v560
        %v562 = vrot.slane %v276, 2
        %v563 = vsel %vm510, %v560, %v562
        %v564 = vrot.slane %v277, 2
        %v565 = vsel %vm510, %v562, %v564
        %v566 = vrot.slane %v278, 2
        %v567 = vsel %vm510, %v564, %v566
        %v568 = vrot.slane %v279, 2
        %v569 = vsel %vm510, %v566, %v568
        %v570 = vrot.slane %v280, 2
        %v571 = vsel %vm510, %v568, %v570
        %v572 = vrot.slane %v281, 2
        %v573 = vsel %vm510, %v570, %v572
        %v574 = vrot.slane %v282, 2
        %v575 = vsel %vm510, %v572, %v574
        %v576 = vrot.slane %v283, 2
        %v577 = vsel %vm510, %v574, %v576
        %v578 = vrot.slane %v284, 2
        %v579 = vsel %vm510, %v576, %v578
        %v580 = vrot.slane %v285, 2
        %v581 = vsel %vm510, %v578, %v580
        %v582 = vrot.slane %v286, 2
        %v583 = vsel %vm510, %v580, %v582
        %584 = vrot.lane.b32.xlu0 %v513, 8
        %v585 = vpop.permute.xlu0 %584
        %586 = vrot.lane.b32.xlu0 %v515, 8
        %v587 = vpop.permute.xlu0 %586
        %588 = vrot.lane.b32.xlu0 %v517, 8
        %v589 = vpop.permute.xlu0 %588
        %590 = vrot.lane.b32.xlu0 %v519, 8
        %v591 = vpop.permute.xlu0 %590
        %592 = vrot.lane.b32.xlu0 %v521, 8
        %v593 = vpop.permute.xlu0 %592
        %594 = vrot.lane.b32.xlu0 %v523, 8
        %v595 = vpop.permute.xlu0 %594
        %596 = vrot.lane.b32.xlu0 %v525, 8
        %v597 = vpop.permute.xlu0 %596
        %598 = vrot.lane.b32.xlu0 %v527, 8
        %v599 = vpop.permute.xlu0 %598
        %600 = vrot.lane.b32.xlu0 %v529, 8
        %v601 = vpop.permute.xlu0 %600
        %602 = vrot.lane.b32.xlu0 %v531, 8
        %v603 = vpop.permute.xlu0 %602
        %604 = vrot.lane.b32.xlu0 %v533, 8
        %v605 = vpop.permute.xlu0 %604
        %606 = vrot.lane.b32.xlu0 %v535, 8
        %v607 = vpop.permute.xlu0 %606
        %608 = vrot.lane.b32.xlu0 %v537, 8
        %v609 = vpop.permute.xlu0 %608
        %610 = vrot.lane.b32.xlu0 %v539, 8
        %v611 = vpop.permute.xlu0 %610
        %612 = vrot.lane.b32.xlu0 %v541, 8
        %v613 = vpop.permute.xlu0 %612
        %614 = vrot.lane.b32.xlu0 %v543, 8
        %v615 = vpop.permute.xlu0 %614
        %616 = vrot.lane.b32.xlu0 %v545, 8
        %v617 = vpop.permute.xlu0 %616
        %618 = vrot.lane.b32.xlu0 %v547, 8
        %v619 = vpop.permute.xlu0 %618
        %620 = vrot.lane.b32.xlu0 %v549, 8
        %v621 = vpop.permute.xlu0 %620
        %622 = vrot.lane.b32.xlu0 %v551, 8
        %v623 = vpop.permute.xlu0 %622
        %624 = vrot.lane.b32.xlu0 %v553, 8
        %v625 = vpop.permute.xlu0 %624
        %626 = vrot.lane.b32.xlu0 %v555, 8
        %v627 = vpop.permute.xlu0 %626
        %628 = vrot.lane.b32.xlu0 %v557, 8
        %v629 = vpop.permute.xlu0 %628
        %630 = vrot.lane.b32.xlu0 %v559, 8
        %v631 = vpop.permute.xlu0 %630
        %632 = vrot.lane.b32.xlu0 %v561, 8
        %v633 = vpop.permute.xlu0 %632
        %634 = vrot.lane.b32.xlu0 %v563, 8
        %v635 = vpop.permute.xlu0 %634
        %636 = vrot.lane.b32.xlu0 %v565, 8
        %v637 = vpop.permute.xlu0 %636
        %638 = vrot.lane.b32.xlu0 %v567, 8
        %v639 = vpop.permute.xlu0 %638
        %640 = vrot.lane.b32.xlu0 %v569, 8
        %v641 = vpop.permute.xlu0 %640
        %642 = vrot.lane.b32.xlu0 %v571, 8
        %v643 = vpop.permute.xlu0 %642
        %644 = vrot.lane.b32.xlu0 %v573, 8
        %v645 = vpop.permute.xlu0 %644
        %646 = vrot.lane.b32.xlu0 %v575, 8
        %v647 = vpop.permute.xlu0 %646
        %648 = vrot.lane.b32.xlu0 %v577, 8
        %v649 = vpop.permute.xlu0 %648
        %650 = vrot.lane.b32.xlu0 %v579, 8
        %v651 = vpop.permute.xlu0 %650
        %652 = vrot.lane.b32.xlu0 %v581, 8
        %v653 = vpop.permute.xlu0 %652
        %654 = vrot.lane.b32.xlu0 %v583, 8
        %v655 = vpop.permute.xlu0 %654
        %v694 = vrot.slane %v287, 2
        %v695 = vsel %vm510, %v582, %v694
        %v696 = vrot.slane %v288, 2
        %v697 = vsel %vm510, %v694, %v696
        %698 = vrot.lane.b32.xlu0 %v517, 12
        %v699 = vpop.permute.xlu0 %698
        %700 = vrot.lane.b32.xlu0 %v519, 12
        %v701 = vpop.permute.xlu0 %700
        %702 = vrot.lane.b32.xlu0 %v521, 12
        %v703 = vpop.permute.xlu0 %702
        %704 = vrot.lane.b32.xlu0 %v523, 12
        %v705 = vpop.permute.xlu0 %704
        %706 = vrot.lane.b32.xlu0 %v525, 12
        %v707 = vpop.permute.xlu0 %706
        %708 = vrot.lane.b32.xlu0 %v527, 12
        %v709 = vpop.permute.xlu0 %708
        %710 = vrot.lane.b32.xlu0 %v529, 12
        %v711 = vpop.permute.xlu0 %710
        %712 = vrot.lane.b32.xlu0 %v531, 12
        %v713 = vpop.permute.xlu0 %712
        %714 = vrot.lane.b32.xlu0 %v533, 12
        %v715 = vpop.permute.xlu0 %714
        %716 = vrot.lane.b32.xlu0 %v535, 12
        %v717 = vpop.permute.xlu0 %716
        %718 = vrot.lane.b32.xlu0 %v537, 12
        %v719 = vpop.permute.xlu0 %718
        %720 = vrot.lane.b32.xlu0 %v539, 12
        %v721 = vpop.permute.xlu0 %720
        %722 = vrot.lane.b32.xlu0 %v541, 12
        %v723 = vpop.permute.xlu0 %722
        %724 = vrot.lane.b32.xlu0 %v543, 12
        %v725 = vpop.permute.xlu0 %724
        %726 = vrot.lane.b32.xlu0 %v545, 12
        %v727 = vpop.permute.xlu0 %726
        %728 = vrot.lane.b32.xlu0 %v547, 12
        %v729 = vpop.permute.xlu0 %728
        %730 = vrot.lane.b32.xlu0 %v549, 12
        %v731 = vpop.permute.xlu0 %730
        %732 = vrot.lane.b32.xlu0 %v551, 12
        %v733 = vpop.permute.xlu0 %732
        %734 = vrot.lane.b32.xlu0 %v553, 12
        %v735 = vpop.permute.xlu0 %734
        %736 = vrot.lane.b32.xlu0 %v555, 12
        %v737 = vpop.permute.xlu0 %736
        %738 = vrot.lane.b32.xlu0 %v557, 12
        %v739 = vpop.permute.xlu0 %738
        %740 = vrot.lane.b32.xlu0 %v559, 12
        %v741 = vpop.permute.xlu0 %740
        %742 = vrot.lane.b32.xlu0 %v561, 12
        %v743 = vpop.permute.xlu0 %742
        %744 = vrot.lane.b32.xlu0 %v563, 12
        %v745 = vpop.permute.xlu0 %744
        %746 = vrot.lane.b32.xlu0 %v565, 12
        %v747 = vpop.permute.xlu0 %746
        %748 = vrot.lane.b32.xlu0 %v567, 12
        %v749 = vpop.permute.xlu0 %748
        %750 = vrot.lane.b32.xlu0 %v569, 12
        %v751 = vpop.permute.xlu0 %750
        %752 = vrot.lane.b32.xlu0 %v571, 12
        %v753 = vpop.permute.xlu0 %752
        %754 = vrot.lane.b32.xlu0 %v573, 12
        %v755 = vpop.permute.xlu0 %754
        %756 = vrot.lane.b32.xlu0 %v575, 12
        %v757 = vpop.permute.xlu0 %756
        %758 = vrot.lane.b32.xlu0 %v577, 12
        %v759 = vpop.permute.xlu0 %758
        %760 = vrot.lane.b32.xlu0 %v579, 12
        %v761 = vpop.permute.xlu0 %760
        %762 = vrot.lane.b32.xlu0 %v581, 12
        %v763 = vpop.permute.xlu0 %762
        %764 = vrot.lane.b32.xlu0 %v583, 12
        %v765 = vpop.permute.xlu0 %764
        %766 = vrot.lane.b32.xlu0 %v695, 12
        %v767 = vpop.permute.xlu0 %766
        %768 = vrot.lane.b32.xlu0 %v697, 12
        %v769 = vpop.permute.xlu0 %768
        %vm806 = vcmask 1044480
        %v807 = vrot.slane %v252, 3
        %v808 = vrot.slane %v253, 3
        %v809 = vsel %vm806, %v807, %v808
        %v810 = vrot.slane %v254, 3
        %v811 = vsel %vm806, %v808, %v810
        %v812 = vrot.slane %v255, 3
        %v813 = vsel %vm806, %v810, %v812
        %v814 = vrot.slane %v256, 3
        %v815 = vsel %vm806, %v812, %v814
        %v816 = vrot.slane %v257, 3
        %v817 = vsel %vm806, %v814, %v816
        %v818 = vrot.slane %v258, 3
        %v819 = vsel %vm806, %v816, %v818
        %v820 = vrot.slane %v259, 3
        %v821 = vsel %vm806, %v818, %v820
        %v822 = vrot.slane %v260, 3
        %v823 = vsel %vm806, %v820, %v822
        %v824 = vrot.slane %v261, 3
        %v825 = vsel %vm806, %v822, %v824
        %v826 = vrot.slane %v262, 3
        %v827 = vsel %vm806, %v824, %v826
        %v828 = vrot.slane %v263, 3
        %v829 = vsel %vm806, %v826, %v828
        %v830 = vrot.slane %v264, 3
        %v831 = vsel %vm806, %v828, %v830
        %v832 = vrot.slane %v265, 3
        %v833 = vsel %vm806, %v830, %v832
        %v834 = vrot.slane %v266, 3
        %v835 = vsel %vm806, %v832, %v834
        %v836 = vrot.slane %v267, 3
        %v837 = vsel %vm806, %v834, %v836
        %v838 = vrot.slane %v268, 3
        %v839 = vsel %vm806, %v836, %v838
        %v840 = vrot.slane %v269, 3
        %v841 = vsel %vm806, %v838, %v840
        %v842 = vrot.slane %v270, 3
        %v843 = vsel %vm806, %v840, %v842
        %v844 = vrot.slane %v271, 3
        %v845 = vsel %vm806, %v842, %v844
        %v846 = vrot.slane %v272, 3
        %v847 = vsel %vm806, %v844, %v846
        %v848 = vrot.slane %v273, 3
        %v849 = vsel %vm806, %v846, %v848
        %v850 = vrot.slane %v274, 3
        %v851 = vsel %vm806, %v848, %v850
        %v852 = vrot.slane %v275, 3
        %v853 = vsel %vm806, %v850, %v852
        %v854 = vrot.slane %v276, 3
        %v855 = vsel %vm806, %v852, %v854
        %v856 = vrot.slane %v277, 3
        %v857 = vsel %vm806, %v854, %v856
        %v858 = vrot.slane %v278, 3
        %v859 = vsel %vm806, %v856, %v858
        %v860 = vrot.slane %v279, 3
        %v861 = vsel %vm806, %v858, %v860
        %v862 = vrot.slane %v280, 3
        %v863 = vsel %vm806, %v860, %v862
        %v864 = vrot.slane %v281, 3
        %v865 = vsel %vm806, %v862, %v864
        %v866 = vrot.slane %v282, 3
        %v867 = vsel %vm806, %v864, %v866
        %v868 = vrot.slane %v283, 3
        %v869 = vsel %vm806, %v866, %v868
        %v870 = vrot.slane %v284, 3
        %v871 = vsel %vm806, %v868, %v870
        %v872 = vrot.slane %v285, 3
        %v873 = vsel %vm806, %v870, %v872
        %v874 = vrot.slane %v286, 3
        %v875 = vsel %vm806, %v872, %v874
        %v876 = vrot.slane %v287, 3
        %v877 = vsel %vm806, %v874, %v876
        %v878 = vrot.slane %v288, 3
        %v879 = vsel %vm806, %v876, %v878
        %880 = vrot.lane.b32.xlu0 %v809, 16
        %v881 = vpop.permute.xlu0 %880
        %882 = vrot.lane.b32.xlu0 %v811, 16
        %v883 = vpop.permute.xlu0 %882
        %884 = vrot.lane.b32.xlu0 %v813, 16
        %v885 = vpop.permute.xlu0 %884
        %886 = vrot.lane.b32.xlu0 %v815, 16
        %v887 = vpop.permute.xlu0 %886
        %888 = vrot.lane.b32.xlu0 %v817, 16
        %v889 = vpop.permute.xlu0 %888
        %890 = vrot.lane.b32.xlu0 %v819, 16
        %v891 = vpop.permute.xlu0 %890
        %892 = vrot.lane.b32.xlu0 %v821, 16
        %v893 = vpop.permute.xlu0 %892
        %894 = vrot.lane.b32.xlu0 %v823, 16
        %v895 = vpop.permute.xlu0 %894
        %896 = vrot.lane.b32.xlu0 %v825, 16
        %v897 = vpop.permute.xlu0 %896
        %898 = vrot.lane.b32.xlu0 %v827, 16
        %v899 = vpop.permute.xlu0 %898
        %900 = vrot.lane.b32.xlu0 %v829, 16
        %v901 = vpop.permute.xlu0 %900
        %902 = vrot.lane.b32.xlu0 %v831, 16
        %v903 = vpop.permute.xlu0 %902
        %904 = vrot.lane.b32.xlu0 %v833, 16
        %v905 = vpop.permute.xlu0 %904
        %906 = vrot.lane.b32.xlu0 %v835, 16
        %v907 = vpop.permute.xlu0 %906
        %908 = vrot.lane.b32.xlu0 %v837, 16
        %v909 = vpop.permute.xlu0 %908
        %910 = vrot.lane.b32.xlu0 %v839, 16
        %v911 = vpop.permute.xlu0 %910
        %912 = vrot.lane.b32.xlu0 %v841, 16
        %v913 = vpop.permute.xlu0 %912
        %914 = vrot.lane.b32.xlu0 %v843, 16
        %v915 = vpop.permute.xlu0 %914
        %916 = vrot.lane.b32.xlu0 %v845, 16
        %v917 = vpop.permute.xlu0 %916
        %918 = vrot.lane.b32.xlu0 %v847, 16
        %v919 = vpop.permute.xlu0 %918
        %920 = vrot.lane.b32.xlu0 %v849, 16
        %v921 = vpop.permute.xlu0 %920
        %922 = vrot.lane.b32.xlu0 %v851, 16
        %v923 = vpop.permute.xlu0 %922
        %924 = vrot.lane.b32.xlu0 %v853, 16
        %v925 = vpop.permute.xlu0 %924
        %926 = vrot.lane.b32.xlu0 %v855, 16
        %v927 = vpop.permute.xlu0 %926
        %928 = vrot.lane.b32.xlu0 %v857, 16
        %v929 = vpop.permute.xlu0 %928
        %930 = vrot.lane.b32.xlu0 %v859, 16
        %v931 = vpop.permute.xlu0 %930
        %932 = vrot.lane.b32.xlu0 %v861, 16
        %v933 = vpop.permute.xlu0 %932
        %934 = vrot.lane.b32.xlu0 %v863, 16
        %v935 = vpop.permute.xlu0 %934
        %936 = vrot.lane.b32.xlu0 %v865, 16
        %v937 = vpop.permute.xlu0 %936
        %938 = vrot.lane.b32.xlu0 %v867, 16
        %v939 = vpop.permute.xlu0 %938
        %940 = vrot.lane.b32.xlu0 %v869, 16
        %v941 = vpop.permute.xlu0 %940
        %942 = vrot.lane.b32.xlu0 %v871, 16
        %v943 = vpop.permute.xlu0 %942
        %944 = vrot.lane.b32.xlu0 %v873, 16
        %v945 = vpop.permute.xlu0 %944
        %946 = vrot.lane.b32.xlu0 %v875, 16
        %v947 = vpop.permute.xlu0 %946
        %948 = vrot.lane.b32.xlu0 %v877, 16
        %v949 = vpop.permute.xlu0 %948
        %950 = vrot.lane.b32.xlu0 %v879, 16
        %v951 = vpop.permute.xlu0 %950
        %vm988 = vcmask 1043456
        %v989 = vrot.slane %v252, 4
        %v990 = vrot.slane %v253, 4
        %v991 = vsel %vm988, %v989, %v990
        %v992 = vrot.slane %v254, 4
        %v993 = vsel %vm988, %v990, %v992
        %v994 = vrot.slane %v255, 4
        %v995 = vsel %vm988, %v992, %v994
        %v996 = vrot.slane %v256, 4
        %v997 = vsel %vm988, %v994, %v996
        %v998 = vrot.slane %v257, 4
        %v999 = vsel %vm988, %v996, %v998
        %v1000 = vrot.slane %v258, 4
        %v1001 = vsel %vm988, %v998, %v1000
        %v1002 = vrot.slane %v259, 4
        %v1003 = vsel %vm988, %v1000, %v1002
        %v1004 = vrot.slane %v260, 4
        %v1005 = vsel %vm988, %v1002, %v1004
        %v1006 = vrot.slane %v261, 4
        %v1007 = vsel %vm988, %v1004, %v1006
        %v1008 = vrot.slane %v262, 4
        %v1009 = vsel %vm988, %v1006, %v1008
        %v1010 = vrot.slane %v263, 4
        %v1011 = vsel %vm988, %v1008, %v1010
        %v1012 = vrot.slane %v264, 4
        %v1013 = vsel %vm988, %v1010, %v1012
        %v1014 = vrot.slane %v265, 4
        %v1015 = vsel %vm988, %v1012, %v1014
        %v1016 = vrot.slane %v266, 4
        %v1017 = vsel %vm988, %v1014, %v1016
        %v1018 = vrot.slane %v267, 4
        %v1019 = vsel %vm988, %v1016, %v1018
        %v1020 = vrot.slane %v268, 4
        %v1021 = vsel %vm988, %v1018, %v1020
        %v1022 = vrot.slane %v269, 4
        %v1023 = vsel %vm988, %v1020, %v1022
        %v1024 = vrot.slane %v270, 4
        %v1025 = vsel %vm988, %v1022, %v1024
        %v1026 = vrot.slane %v271, 4
        %v1027 = vsel %vm988, %v1024, %v1026
        %v1028 = vrot.slane %v272, 4
        %v1029 = vsel %vm988, %v1026, %v1028
        %v1030 = vrot.slane %v273, 4
        %v1031 = vsel %vm988, %v1028, %v1030
        %v1032 = vrot.slane %v274, 4
        %v1033 = vsel %vm988, %v1030, %v1032
        %v1034 = vrot.slane %v275, 4
        %v1035 = vsel %vm988, %v1032, %v1034
        %v1036 = vrot.slane %v276, 4
        %v1037 = vsel %vm988, %v1034, %v1036
        %v1038 = vrot.slane %v277, 4
        %v1039 = vsel %vm988, %v1036, %v1038
        %v1040 = vrot.slane %v278, 4
        %v1041 = vsel %vm988, %v1038, %v1040
        %v1042 = vrot.slane %v279, 4
        %v1043 = vsel %vm988, %v1040, %v1042
        %v1044 = vrot.slane %v280, 4
        %v1045 = vsel %vm988, %v1042, %v1044
        %v1046 = vrot.slane %v281, 4
        %v1047 = vsel %vm988, %v1044, %v1046
        %v1048 = vrot.slane %v282, 4
        %v1049 = vsel %vm988, %v1046, %v1048
        %v1050 = vrot.slane %v283, 4
        %v1051 = vsel %vm988, %v1048, %v1050
        %v1052 = vrot.slane %v284, 4
        %v1053 = vsel %vm988, %v1050, %v1052
        %v1054 = vrot.slane %v285, 4
        %v1055 = vsel %vm988, %v1052, %v1054
        %v1056 = vrot.slane %v286, 4
        %v1057 = vsel %vm988, %v1054, %v1056
        %v1058 = vrot.slane %v287, 4
        %v1059 = vsel %vm988, %v1056, %v1058
        %v1060 = vrot.slane %v288, 4
        %v1061 = vsel %vm988, %v1058, %v1060
        %1062 = vrot.lane.b32.xlu0 %v991, 20
        %v1063 = vpop.permute.xlu0 %1062
        %1064 = vrot.lane.b32.xlu0 %v993, 20
        %v1065 = vpop.permute.xlu0 %1064
        %1066 = vrot.lane.b32.xlu0 %v995, 20
        %v1067 = vpop.permute.xlu0 %1066
        %1068 = vrot.lane.b32.xlu0 %v997, 20
        %v1069 = vpop.permute.xlu0 %1068
        %1070 = vrot.lane.b32.xlu0 %v999, 20
        %v1071 = vpop.permute.xlu0 %1070
        %1072 = vrot.lane.b32.xlu0 %v1001, 20
        %v1073 = vpop.permute.xlu0 %1072
        %1074 = vrot.lane.b32.xlu0 %v1003, 20
        %v1075 = vpop.permute.xlu0 %1074
        %1076 = vrot.lane.b32.xlu0 %v1005, 20
        %v1077 = vpop.permute.xlu0 %1076
        %1078 = vrot.lane.b32.xlu0 %v1007, 20
        %v1079 = vpop.permute.xlu0 %1078
        %1080 = vrot.lane.b32.xlu0 %v1009, 20
        %v1081 = vpop.permute.xlu0 %1080
        %1082 = vrot.lane.b32.xlu0 %v1011, 20
        %v1083 = vpop.permute.xlu0 %1082
        %1084 = vrot.lane.b32.xlu0 %v1013, 20
        %v1085 = vpop.permute.xlu0 %1084
        %1086 = vrot.lane.b32.xlu0 %v1015, 20
        %v1087 = vpop.permute.xlu0 %1086
        %1088 = vrot.lane.b32.xlu0 %v1017, 20
        %v1089 = vpop.permute.xlu0 %1088
        %1090 = vrot.lane.b32.xlu0 %v1019, 20
        %v1091 = vpop.permute.xlu0 %1090
        %1092 = vrot.lane.b32.xlu0 %v1021, 20
        %v1093 = vpop.permute.xlu0 %1092
        %1094 = vrot.lane.b32.xlu0 %v1023, 20
        %v1095 = vpop.permute.xlu0 %1094
        %1096 = vrot.lane.b32.xlu0 %v1025, 20
        %v1097 = vpop.permute.xlu0 %1096
        %1098 = vrot.lane.b32.xlu0 %v1027, 20
        %v1099 = vpop.permute.xlu0 %1098
        %1100 = vrot.lane.b32.xlu0 %v1029, 20
        %v1101 = vpop.permute.xlu0 %1100
        %1102 = vrot.lane.b32.xlu0 %v1031, 20
        %v1103 = vpop.permute.xlu0 %1102
        %1104 = vrot.lane.b32.xlu0 %v1033, 20
        %v1105 = vpop.permute.xlu0 %1104
        %1106 = vrot.lane.b32.xlu0 %v1035, 20
        %v1107 = vpop.permute.xlu0 %1106
        %1108 = vrot.lane.b32.xlu0 %v1037, 20
        %v1109 = vpop.permute.xlu0 %1108
        %1110 = vrot.lane.b32.xlu0 %v1039, 20
        %v1111 = vpop.permute.xlu0 %1110
        %1112 = vrot.lane.b32.xlu0 %v1041, 20
        %v1113 = vpop.permute.xlu0 %1112
        %1114 = vrot.lane.b32.xlu0 %v1043, 20
        %v1115 = vpop.permute.xlu0 %1114
        %1116 = vrot.lane.b32.xlu0 %v1045, 20
        %v1117 = vpop.permute.xlu0 %1116
        %1118 = vrot.lane.b32.xlu0 %v1047, 20
        %v1119 = vpop.permute.xlu0 %1118
        %1120 = vrot.lane.b32.xlu0 %v1049, 20
        %v1121 = vpop.permute.xlu0 %1120
        %1122 = vrot.lane.b32.xlu0 %v1051, 20
        %v1123 = vpop.permute.xlu0 %1122
        %1124 = vrot.lane.b32.xlu0 %v1053, 20
        %v1125 = vpop.permute.xlu0 %1124
        %1126 = vrot.lane.b32.xlu0 %v1055, 20
        %v1127 = vpop.permute.xlu0 %1126
        %1128 = vrot.lane.b32.xlu0 %v1057, 20
        %v1129 = vpop.permute.xlu0 %1128
        %1130 = vrot.lane.b32.xlu0 %v1059, 20
        %v1131 = vpop.permute.xlu0 %1130
        %1132 = vrot.lane.b32.xlu0 %v1061, 20
        %v1133 = vpop.permute.xlu0 %1132
        %v1172 = vrot.slane %v289, 4
        %v1173 = vsel %vm988, %v1060, %v1172
        %v1174 = vrot.slane %v290, 4
        %v1175 = vsel %vm988, %v1172, %v1174
        %1176 = vrot.lane.b32.xlu0 %v995, 24
        %v1177 = vpop.permute.xlu0 %1176
        %1178 = vrot.lane.b32.xlu0 %v997, 24
        %v1179 = vpop.permute.xlu0 %1178
        %1180 = vrot.lane.b32.xlu0 %v999, 24
        %v1181 = vpop.permute.xlu0 %1180
        %1182 = vrot.lane.b32.xlu0 %v1001, 24
        %v1183 = vpop.permute.xlu0 %1182
        %1184 = vrot.lane.b32.xlu0 %v1003, 24
        %v1185 = vpop.permute.xlu0 %1184
        %1186 = vrot.lane.b32.xlu0 %v1005, 24
        %v1187 = vpop.permute.xlu0 %1186
        %1188 = vrot.lane.b32.xlu0 %v1007, 24
        %v1189 = vpop.permute.xlu0 %1188
        %1190 = vrot.lane.b32.xlu0 %v1009, 24
        %v1191 = vpop.permute.xlu0 %1190
        %1192 = vrot.lane.b32.xlu0 %v1011, 24
        %v1193 = vpop.permute.xlu0 %1192
        %1194 = vrot.lane.b32.xlu0 %v1013, 24
        %v1195 = vpop.permute.xlu0 %1194
        %1196 = vrot.lane.b32.xlu0 %v1015, 24
        %v1197 = vpop.permute.xlu0 %1196
        %1198 = vrot.lane.b32.xlu0 %v1017, 24
        %v1199 = vpop.permute.xlu0 %1198
        %1200 = vrot.lane.b32.xlu0 %v1019, 24
        %v1201 = vpop.permute.xlu0 %1200
        %1202 = vrot.lane.b32.xlu0 %v1021, 24
        %v1203 = vpop.permute.xlu0 %1202
        %1204 = vrot.lane.b32.xlu0 %v1023, 24
        %v1205 = vpop.permute.xlu0 %1204
        %1206 = vrot.lane.b32.xlu0 %v1025, 24
        %v1207 = vpop.permute.xlu0 %1206
        %1208 = vrot.lane.b32.xlu0 %v1027, 24
        %v1209 = vpop.permute.xlu0 %1208
        %1210 = vrot.lane.b32.xlu0 %v1029, 24
        %v1211 = vpop.permute.xlu0 %1210
        %1212 = vrot.lane.b32.xlu0 %v1031, 24
        %v1213 = vpop.permute.xlu0 %1212
        %1214 = vrot.lane.b32.xlu0 %v1033, 24
        %v1215 = vpop.permute.xlu0 %1214
        %1216 = vrot.lane.b32.xlu0 %v1035, 24
        %v1217 = vpop.permute.xlu0 %1216
        %1218 = vrot.lane.b32.xlu0 %v1037, 24
        %v1219 = vpop.permute.xlu0 %1218
        %1220 = vrot.lane.b32.xlu0 %v1039, 24
        %v1221 = vpop.permute.xlu0 %1220
        %1222 = vrot.lane.b32.xlu0 %v1041, 24
        %v1223 = vpop.permute.xlu0 %1222
        %1224 = vrot.lane.b32.xlu0 %v1043, 24
        %v1225 = vpop.permute.xlu0 %1224
        %1226 = vrot.lane.b32.xlu0 %v1045, 24
        %v1227 = vpop.permute.xlu0 %1226
        %1228 = vrot.lane.b32.xlu0 %v1047, 24
        %v1229 = vpop.permute.xlu0 %1228
        %1230 = vrot.lane.b32.xlu0 %v1049, 24
        %v1231 = vpop.permute.xlu0 %1230
        %1232 = vrot.lane.b32.xlu0 %v1051, 24
        %v1233 = vpop.permute.xlu0 %1232
        %1234 = vrot.lane.b32.xlu0 %v1053, 24
        %v1235 = vpop.permute.xlu0 %1234
        %1236 = vrot.lane.b32.xlu0 %v1055, 24
        %v1237 = vpop.permute.xlu0 %1236
        %1238 = vrot.lane.b32.xlu0 %v1057, 24
        %v1239 = vpop.permute.xlu0 %1238
        %1240 = vrot.lane.b32.xlu0 %v1059, 24
        %v1241 = vpop.permute.xlu0 %1240
        %1242 = vrot.lane.b32.xlu0 %v1061, 24
        %v1243 = vpop.permute.xlu0 %1242
        %1244 = vrot.lane.b32.xlu0 %v1173, 24
        %v1245 = vpop.permute.xlu0 %1244
        %1246 = vrot.lane.b32.xlu0 %v1175, 24
        %v1247 = vpop.permute.xlu0 %1246
        %vm1284 = vcmask 1042432
        %v1285 = vrot.slane %v254, 5
        %v1286 = vrot.slane %v255, 5
        %v1287 = vsel %vm1284, %v1285, %v1286
        %v1288 = vrot.slane %v256, 5
        %v1289 = vsel %vm1284, %v1286, %v1288
        %v1290 = vrot.slane %v257, 5
        %v1291 = vsel %vm1284, %v1288, %v1290
        %v1292 = vrot.slane %v258, 5
        %v1293 = vsel %vm1284, %v1290, %v1292
        %v1294 = vrot.slane %v259, 5
        %v1295 = vsel %vm1284, %v1292, %v1294
        %v1296 = vrot.slane %v260, 5
        %v1297 = vsel %vm1284, %v1294, %v1296
        %v1298 = vrot.slane %v261, 5
        %v1299 = vsel %vm1284, %v1296, %v1298
        %v1300 = vrot.slane %v262, 5
        %v1301 = vsel %vm1284, %v1298, %v1300
        %v1302 = vrot.slane %v263, 5
        %v1303 = vsel %vm1284, %v1300, %v1302
        %v1304 = vrot.slane %v264, 5
        %v1305 = vsel %vm1284, %v1302, %v1304
        %v1306 = vrot.slane %v265, 5
        %v1307 = vsel %vm1284, %v1304, %v1306
        %v1308 = vrot.slane %v266, 5
        %v1309 = vsel %vm1284, %v1306, %v1308
        %v1310 = vrot.slane %v267, 5
        %v1311 = vsel %vm1284, %v1308, %v1310
        %v1312 = vrot.slane %v268, 5
        %v1313 = vsel %vm1284, %v1310, %v1312
        %v1314 = vrot.slane %v269, 5
        %v1315 = vsel %vm1284, %v1312, %v1314
        %v1316 = vrot.slane %v270, 5
        %v1317 = vsel %vm1284, %v1314, %v1316
        %v1318 = vrot.slane %v271, 5
        %v1319 = vsel %vm1284, %v1316, %v1318
        %v1320 = vrot.slane %v272, 5
        %v1321 = vsel %vm1284, %v1318, %v1320
        %v1322 = vrot.slane %v273, 5
        %v1323 = vsel %vm1284, %v1320, %v1322
        %v1324 = vrot.slane %v274, 5
        %v1325 = vsel %vm1284, %v1322, %v1324
        %v1326 = vrot.slane %v275, 5
        %v1327 = vsel %vm1284, %v1324, %v1326
        %v1328 = vrot.slane %v276, 5
        %v1329 = vsel %vm1284, %v1326, %v1328
        %v1330 = vrot.slane %v277, 5
        %v1331 = vsel %vm1284, %v1328, %v1330
        %v1332 = vrot.slane %v278, 5
        %v1333 = vsel %vm1284, %v1330, %v1332
        %v1334 = vrot.slane %v279, 5
        %v1335 = vsel %vm1284, %v1332, %v1334
        %v1336 = vrot.slane %v280, 5
        %v1337 = vsel %vm1284, %v1334, %v1336
        %v1338 = vrot.slane %v281, 5
        %v1339 = vsel %vm1284, %v1336, %v1338
        %v1340 = vrot.slane %v282, 5
        %v1341 = vsel %vm1284, %v1338, %v1340
        %v1342 = vrot.slane %v283, 5
        %v1343 = vsel %vm1284, %v1340, %v1342
        %v1344 = vrot.slane %v284, 5
        %v1345 = vsel %vm1284, %v1342, %v1344
        %v1346 = vrot.slane %v285, 5
        %v1347 = vsel %vm1284, %v1344, %v1346
        %v1348 = vrot.slane %v286, 5
        %v1349 = vsel %vm1284, %v1346, %v1348
        %v1350 = vrot.slane %v287, 5
        %v1351 = vsel %vm1284, %v1348, %v1350
        %v1352 = vrot.slane %v288, 5
        %v1353 = vsel %vm1284, %v1350, %v1352
        %v1354 = vrot.slane %v289, 5
        %v1355 = vsel %vm1284, %v1352, %v1354
        %v1356 = vrot.slane %v290, 5
        %v1357 = vsel %vm1284, %v1354, %v1356
        %1358 = vrot.lane.b32.xlu0 %v1287, 28
        %v1359 = vpop.permute.xlu0 %1358
        %1360 = vrot.lane.b32.xlu0 %v1289, 28
        %v1361 = vpop.permute.xlu0 %1360
        %1362 = vrot.lane.b32.xlu0 %v1291, 28
        %v1363 = vpop.permute.xlu0 %1362
        %1364 = vrot.lane.b32.xlu0 %v1293, 28
        %v1365 = vpop.permute.xlu0 %1364
        %1366 = vrot.lane.b32.xlu0 %v1295, 28
        %v1367 = vpop.permute.xlu0 %1366
        %1368 = vrot.lane.b32.xlu0 %v1297, 28
        %v1369 = vpop.permute.xlu0 %1368
        %1370 = vrot.lane.b32.xlu0 %v1299, 28
        %v1371 = vpop.permute.xlu0 %1370
        %1372 = vrot.lane.b32.xlu0 %v1301, 28
        %v1373 = vpop.permute.xlu0 %1372
        %1374 = vrot.lane.b32.xlu0 %v1303, 28
        %v1375 = vpop.permute.xlu0 %1374
        %1376 = vrot.lane.b32.xlu0 %v1305, 28
        %v1377 = vpop.permute.xlu0 %1376
        %1378 = vrot.lane.b32.xlu0 %v1307, 28
        %v1379 = vpop.permute.xlu0 %1378
        %1380 = vrot.lane.b32.xlu0 %v1309, 28
        %v1381 = vpop.permute.xlu0 %1380
        %1382 = vrot.lane.b32.xlu0 %v1311, 28
        %v1383 = vpop.permute.xlu0 %1382
        %1384 = vrot.lane.b32.xlu0 %v1313, 28
        %v1385 = vpop.permute.xlu0 %1384
        %1386 = vrot.lane.b32.xlu0 %v1315, 28
        %v1387 = vpop.permute.xlu0 %1386
        %1388 = vrot.lane.b32.xlu0 %v1317, 28
        %v1389 = vpop.permute.xlu0 %1388
        %1390 = vrot.lane.b32.xlu0 %v1319, 28
        %v1391 = vpop.permute.xlu0 %1390
        %1392 = vrot.lane.b32.xlu0 %v1321, 28
        %v1393 = vpop.permute.xlu0 %1392
        %1394 = vrot.lane.b32.xlu0 %v1323, 28
        %v1395 = vpop.permute.xlu0 %1394
        %1396 = vrot.lane.b32.xlu0 %v1325, 28
        %v1397 = vpop.permute.xlu0 %1396
        %1398 = vrot.lane.b32.xlu0 %v1327, 28
        %v1399 = vpop.permute.xlu0 %1398
        %1400 = vrot.lane.b32.xlu0 %v1329, 28
        %v1401 = vpop.permute.xlu0 %1400
        %1402 = vrot.lane.b32.xlu0 %v1331, 28
        %v1403 = vpop.permute.xlu0 %1402
        %1404 = vrot.lane.b32.xlu0 %v1333, 28
        %v1405 = vpop.permute.xlu0 %1404
        %1406 = vrot.lane.b32.xlu0 %v1335, 28
        %v1407 = vpop.permute.xlu0 %1406
        %1408 = vrot.lane.b32.xlu0 %v1337, 28
        %v1409 = vpop.permute.xlu0 %1408
        %1410 = vrot.lane.b32.xlu0 %v1339, 28
        %v1411 = vpop.permute.xlu0 %1410
        %1412 = vrot.lane.b32.xlu0 %v1341, 28
        %v1413 = vpop.permute.xlu0 %1412
        %1414 = vrot.lane.b32.xlu0 %v1343, 28
        %v1415 = vpop.permute.xlu0 %1414
        %1416 = vrot.lane.b32.xlu0 %v1345, 28
        %v1417 = vpop.permute.xlu0 %1416
        %1418 = vrot.lane.b32.xlu0 %v1347, 28
        %v1419 = vpop.permute.xlu0 %1418
        %1420 = vrot.lane.b32.xlu0 %v1349, 28
        %v1421 = vpop.permute.xlu0 %1420
        %1422 = vrot.lane.b32.xlu0 %v1351, 28
        %v1423 = vpop.permute.xlu0 %1422
        %1424 = vrot.lane.b32.xlu0 %v1353, 28
        %v1425 = vpop.permute.xlu0 %1424
        %1426 = vrot.lane.b32.xlu0 %v1355, 28
        %v1427 = vpop.permute.xlu0 %1426
        %1428 = vrot.lane.b32.xlu0 %v1357, 28
        %v1429 = vpop.permute.xlu0 %1428
        %vm1466 = vcmask 1041408
        %v1467 = vrot.slane %v254, 6
        %v1468 = vrot.slane %v255, 6
        %v1469 = vsel %vm1466, %v1467, %v1468
        %v1470 = vrot.slane %v256, 6
        %v1471 = vsel %vm1466, %v1468, %v1470
        %v1472 = vrot.slane %v257, 6
        %v1473 = vsel %vm1466, %v1470, %v1472
        %v1474 = vrot.slane %v258, 6
        %v1475 = vsel %vm1466, %v1472, %v1474
        %v1476 = vrot.slane %v259, 6
        %v1477 = vsel %vm1466, %v1474, %v1476
        %v1478 = vrot.slane %v260, 6
        %v1479 = vsel %vm1466, %v1476, %v1478
        %v1480 = vrot.slane %v261, 6
        %v1481 = vsel %vm1466, %v1478, %v1480
        %v1482 = vrot.slane %v262, 6
        %v1483 = vsel %vm1466, %v1480, %v1482
        %v1484 = vrot.slane %v263, 6
        %v1485 = vsel %vm1466, %v1482, %v1484
        %v1486 = vrot.slane %v264, 6
        %v1487 = vsel %vm1466, %v1484, %v1486
        %v1488 = vrot.slane %v265, 6
        %v1489 = vsel %vm1466, %v1486, %v1488
        %v1490 = vrot.slane %v266, 6
        %v1491 = vsel %vm1466, %v1488, %v1490
        %v1492 = vrot.slane %v267, 6
        %v1493 = vsel %vm1466, %v1490, %v1492
        %v1494 = vrot.slane %v268, 6
        %v1495 = vsel %vm1466, %v1492, %v1494
        %v1496 = vrot.slane %v269, 6
        %v1497 = vsel %vm1466, %v1494, %v1496
        %v1498 = vrot.slane %v270, 6
        %v1499 = vsel %vm1466, %v1496, %v1498
        %v1500 = vrot.slane %v271, 6
        %v1501 = vsel %vm1466, %v1498, %v1500
        %v1502 = vrot.slane %v272, 6
        %v1503 = vsel %vm1466, %v1500, %v1502
        %v1504 = vrot.slane %v273, 6
        %v1505 = vsel %vm1466, %v1502, %v1504
        %v1506 = vrot.slane %v274, 6
        %v1507 = vsel %vm1466, %v1504, %v1506
        %v1508 = vrot.slane %v275, 6
        %v1509 = vsel %vm1466, %v1506, %v1508
        %v1510 = vrot.slane %v276, 6
        %v1511 = vsel %vm1466, %v1508, %v1510
        %v1512 = vrot.slane %v277, 6
        %v1513 = vsel %vm1466, %v1510, %v1512
        %v1514 = vrot.slane %v278, 6
        %v1515 = vsel %vm1466, %v1512, %v1514
        %v1516 = vrot.slane %v279, 6
        %v1517 = vsel %vm1466, %v1514, %v1516
        %v1518 = vrot.slane %v280, 6
        %v1519 = vsel %vm1466, %v1516, %v1518
        %v1520 = vrot.slane %v281, 6
        %v1521 = vsel %vm1466, %v1518, %v1520
        %v1522 = vrot.slane %v282, 6
        %v1523 = vsel %vm1466, %v1520, %v1522
        %v1524 = vrot.slane %v283, 6
        %v1525 = vsel %vm1466, %v1522, %v1524
        %v1526 = vrot.slane %v284, 6
        %v1527 = vsel %vm1466, %v1524, %v1526
        %v1528 = vrot.slane %v285, 6
        %v1529 = vsel %vm1466, %v1526, %v1528
        %v1530 = vrot.slane %v286, 6
        %v1531 = vsel %vm1466, %v1528, %v1530
        %v1532 = vrot.slane %v287, 6
        %v1533 = vsel %vm1466, %v1530, %v1532
        %v1534 = vrot.slane %v288, 6
        %v1535 = vsel %vm1466, %v1532, %v1534
        %v1536 = vrot.slane %v289, 6
        %v1537 = vsel %vm1466, %v1534, %v1536
        %v1538 = vrot.slane %v290, 6
        %v1539 = vsel %vm1466, %v1536, %v1538
        %1540 = vrot.lane.b32.xlu0 %v1469, 32
        %v1541 = vpop.permute.xlu0 %1540
        %1542 = vrot.lane.b32.xlu0 %v1471, 32
        %v1543 = vpop.permute.xlu0 %1542
        %1544 = vrot.lane.b32.xlu0 %v1473, 32
        %v1545 = vpop.permute.xlu0 %1544
        %1546 = vrot.lane.b32.xlu0 %v1475, 32
        %v1547 = vpop.permute.xlu0 %1546
        %1548 = vrot.lane.b32.xlu0 %v1477, 32
        %v1549 = vpop.permute.xlu0 %1548
        %1550 = vrot.lane.b32.xlu0 %v1479, 32
        %v1551 = vpop.permute.xlu0 %1550
        %1552 = vrot.lane.b32.xlu0 %v1481, 32
        %v1553 = vpop.permute.xlu0 %1552
        %1554 = vrot.lane.b32.xlu0 %v1483, 32
        %v1555 = vpop.permute.xlu0 %1554
        %1556 = vrot.lane.b32.xlu0 %v1485, 32
        %v1557 = vpop.permute.xlu0 %1556
        %1558 = vrot.lane.b32.xlu0 %v1487, 32
        %v1559 = vpop.permute.xlu0 %1558
        %1560 = vrot.lane.b32.xlu0 %v1489, 32
        %v1561 = vpop.permute.xlu0 %1560
        %1562 = vrot.lane.b32.xlu0 %v1491, 32
        %v1563 = vpop.permute.xlu0 %1562
        %1564 = vrot.lane.b32.xlu0 %v1493, 32
        %v1565 = vpop.permute.xlu0 %1564
        %1566 = vrot.lane.b32.xlu0 %v1495, 32
        %v1567 = vpop.permute.xlu0 %1566
        %1568 = vrot.lane.b32.xlu0 %v1497, 32
        %v1569 = vpop.permute.xlu0 %1568
        %1570 = vrot.lane.b32.xlu0 %v1499, 32
        %v1571 = vpop.permute.xlu0 %1570
        %1572 = vrot.lane.b32.xlu0 %v1501, 32
        %v1573 = vpop.permute.xlu0 %1572
        %1574 = vrot.lane.b32.xlu0 %v1503, 32
        %v1575 = vpop.permute.xlu0 %1574
        %1576 = vrot.lane.b32.xlu0 %v1505, 32
        %v1577 = vpop.permute.xlu0 %1576
        %1578 = vrot.lane.b32.xlu0 %v1507, 32
        %v1579 = vpop.permute.xlu0 %1578
        %1580 = vrot.lane.b32.xlu0 %v1509, 32
        %v1581 = vpop.permute.xlu0 %1580
        %1582 = vrot.lane.b32.xlu0 %v1511, 32
        %v1583 = vpop.permute.xlu0 %1582
        %1584 = vrot.lane.b32.xlu0 %v1513, 32
        %v1585 = vpop.permute.xlu0 %1584
        %1586 = vrot.lane.b32.xlu0 %v1515, 32
        %v1587 = vpop.permute.xlu0 %1586
        %1588 = vrot.lane.b32.xlu0 %v1517, 32
        %v1589 = vpop.permute.xlu0 %1588
        %1590 = vrot.lane.b32.xlu0 %v1519, 32
        %v1591 = vpop.permute.xlu0 %1590
        %1592 = vrot.lane.b32.xlu0 %v1521, 32
        %v1593 = vpop.permute.xlu0 %1592
        %1594 = vrot.lane.b32.xlu0 %v1523, 32
        %v1595 = vpop.permute.xlu0 %1594
        %1596 = vrot.lane.b32.xlu0 %v1525, 32
        %v1597 = vpop.permute.xlu0 %1596
        %1598 = vrot.lane.b32.xlu0 %v1527, 32
        %v1599 = vpop.permute.xlu0 %1598
        %1600 = vrot.lane.b32.xlu0 %v1529, 32
        %v1601 = vpop.permute.xlu0 %1600
        %1602 = vrot.lane.b32.xlu0 %v1531, 32
        %v1603 = vpop.permute.xlu0 %1602
        %1604 = vrot.lane.b32.xlu0 %v1533, 32
        %v1605 = vpop.permute.xlu0 %1604
        %1606 = vrot.lane.b32.xlu0 %v1535, 32
        %v1607 = vpop.permute.xlu0 %1606
        %1608 = vrot.lane.b32.xlu0 %v1537, 32
        %v1609 = vpop.permute.xlu0 %1608
        %1610 = vrot.lane.b32.xlu0 %v1539, 32
        %v1611 = vpop.permute.xlu0 %1610
        %vm1648 = vcmask 31744
        %v1649 = vsel %vm1648, %v250, %v403
        %v1650 = vsel %vm1648, %v251, %v405
        %v1651 = vsel %vm1648, %v252, %v407
        %v1652 = vsel %vm1648, %v253, %v409
        %v1653 = vsel %vm1648, %v254, %v411
        %v1654 = vsel %vm1648, %v255, %v413
        %v1655 = vsel %vm1648, %v256, %v415
        %v1656 = vsel %vm1648, %v257, %v417
        %v1657 = vsel %vm1648, %v258, %v419
        %v1658 = vsel %vm1648, %v259, %v421
        %v1659 = vsel %vm1648, %v260, %v423
        %v1660 = vsel %vm1648, %v261, %v425
        %v1661 = vsel %vm1648, %v262, %v427
        %v1662 = vsel %vm1648, %v263, %v429
        %v1663 = vsel %vm1648, %v264, %v431
        %v1664 = vsel %vm1648, %v265, %v433
        %v1665 = vsel %vm1648, %v266, %v435
        %v1666 = vsel %vm1648, %v267, %v437
        %v1667 = vsel %vm1648, %v268, %v439
        %v1668 = vsel %vm1648, %v269, %v441
        %v1669 = vsel %vm1648, %v270, %v443
        %v1670 = vsel %vm1648, %v271, %v445
        %v1671 = vsel %vm1648, %v272, %v447
        %v1672 = vsel %vm1648, %v273, %v449
        %v1673 = vsel %vm1648, %v274, %v451
        %v1674 = vsel %vm1648, %v275, %v453
        %v1675 = vsel %vm1648, %v276, %v455
        %v1676 = vsel %vm1648, %v277, %v457
        %v1677 = vsel %vm1648, %v278, %v459
        %v1678 = vsel %vm1648, %v279, %v461
        %v1679 = vsel %vm1648, %v280, %v463
        %v1680 = vsel %vm1648, %v281, %v465
        %v1681 = vsel %vm1648, %v282, %v467
        %v1682 = vsel %vm1648, %v283, %v469
        %v1683 = vsel %vm1648, %v284, %v471
        %v1684 = vsel %vm1648, %v285, %v473
        %vm1685 = vcmask 64512
        %v1686 = vsel %vm1685, %v1649, %v585
        %v1687 = vsel %vm1685, %v1650, %v587
        %v1688 = vsel %vm1685, %v1651, %v589
        %v1689 = vsel %vm1685, %v1652, %v591
        %v1690 = vsel %vm1685, %v1653, %v593
        %v1691 = vsel %vm1685, %v1654, %v595
        %v1692 = vsel %vm1685, %v1655, %v597
        %v1693 = vsel %vm1685, %v1656, %v599
        %v1694 = vsel %vm1685, %v1657, %v601
        %v1695 = vsel %vm1685, %v1658, %v603
        %v1696 = vsel %vm1685, %v1659, %v605
        %v1697 = vsel %vm1685, %v1660, %v607
        %v1698 = vsel %vm1685, %v1661, %v609
        %v1699 = vsel %vm1685, %v1662, %v611
        %v1700 = vsel %vm1685, %v1663, %v613
        %v1701 = vsel %vm1685, %v1664, %v615
        %v1702 = vsel %vm1685, %v1665, %v617
        %v1703 = vsel %vm1685, %v1666, %v619
        %v1704 = vsel %vm1685, %v1667, %v621
        %v1705 = vsel %vm1685, %v1668, %v623
        %v1706 = vsel %vm1685, %v1669, %v625
        %v1707 = vsel %vm1685, %v1670, %v627
        %v1708 = vsel %vm1685, %v1671, %v629
        %v1709 = vsel %vm1685, %v1672, %v631
        %v1710 = vsel %vm1685, %v1673, %v633
        %v1711 = vsel %vm1685, %v1674, %v635
        %v1712 = vsel %vm1685, %v1675, %v637
        %v1713 = vsel %vm1685, %v1676, %v639
        %v1714 = vsel %vm1685, %v1677, %v641
        %v1715 = vsel %vm1685, %v1678, %v643
        %v1716 = vsel %vm1685, %v1679, %v645
        %v1717 = vsel %vm1685, %v1680, %v647
        %v1718 = vsel %vm1685, %v1681, %v649
        %v1719 = vsel %vm1685, %v1682, %v651
        %v1720 = vsel %vm1685, %v1683, %v653
        %v1721 = vsel %vm1685, %v1684, %v655
        %vm1722 = vcmask 97280
        %v1723 = vsel %vm1722, %v1686, %v699
        %v1724 = vsel %vm1722, %v1687, %v701
        %v1725 = vsel %vm1722, %v1688, %v703
        %v1726 = vsel %vm1722, %v1689, %v705
        %v1727 = vsel %vm1722, %v1690, %v707
        %v1728 = vsel %vm1722, %v1691, %v709
        %v1729 = vsel %vm1722, %v1692, %v711
        %v1730 = vsel %vm1722, %v1693, %v713
        %v1731 = vsel %vm1722, %v1694, %v715
        %v1732 = vsel %vm1722, %v1695, %v717
        %v1733 = vsel %vm1722, %v1696, %v719
        %v1734 = vsel %vm1722, %v1697, %v721
        %v1735 = vsel %vm1722, %v1698, %v723
        %v1736 = vsel %vm1722, %v1699, %v725
        %v1737 = vsel %vm1722, %v1700, %v727
        %v1738 = vsel %vm1722, %v1701, %v729
        %v1739 = vsel %vm1722, %v1702, %v731
        %v1740 = vsel %vm1722, %v1703, %v733
        %v1741 = vsel %vm1722, %v1704, %v735
        %v1742 = vsel %vm1722, %v1705, %v737
        %v1743 = vsel %vm1722, %v1706, %v739
        %v1744 = vsel %vm1722, %v1707, %v741
        %v1745 = vsel %vm1722, %v1708, %v743
        %v1746 = vsel %vm1722, %v1709, %v745
        %v1747 = vsel %vm1722, %v1710, %v747
        %v1748 = vsel %vm1722, %v1711, %v749
        %v1749 = vsel %vm1722, %v1712, %v751
        %v1750 = vsel %vm1722, %v1713, %v753
        %v1751 = vsel %vm1722, %v1714, %v755
        %v1752 = vsel %vm1722, %v1715, %v757
        %v1753 = vsel %vm1722, %v1716, %v759
        %v1754 = vsel %vm1722, %v1717, %v761
        %v1755 = vsel %vm1722, %v1718, %v763
        %v1756 = vsel %vm1722, %v1719, %v765
        %v1757 = vsel %vm1722, %v1720, %v767
        %v1758 = vsel %vm1722, %v1721, %v769
        %vm1759 = vcmask 130048
        %v1760 = vsel %vm1759, %v1723, %v881
        %v1761 = vsel %vm1759, %v1724, %v883
        %v1762 = vsel %vm1759, %v1725, %v885
        %v1763 = vsel %vm1759, %v1726, %v887
        %v1764 = vsel %vm1759, %v1727, %v889
        %v1765 = vsel %vm1759, %v1728, %v891
        %v1766 = vsel %vm1759, %v1729, %v893
        %v1767 = vsel %vm1759, %v1730, %v895
        %v1768 = vsel %vm1759, %v1731, %v897
        %v1769 = vsel %vm1759, %v1732, %v899
        %v1770 = vsel %vm1759, %v1733, %v901
        %v1771 = vsel %vm1759, %v1734, %v903
        %v1772 = vsel %vm1759, %v1735, %v905
        %v1773 = vsel %vm1759, %v1736, %v907
        %v1774 = vsel %vm1759, %v1737, %v909
        %v1775 = vsel %vm1759, %v1738, %v911
        %v1776 = vsel %vm1759, %v1739, %v913
        %v1777 = vsel %vm1759, %v1740, %v915
        %v1778 = vsel %vm1759, %v1741, %v917
        %v1779 = vsel %vm1759, %v1742, %v919
        %v1780 = vsel %vm1759, %v1743, %v921
        %v1781 = vsel %vm1759, %v1744, %v923
        %v1782 = vsel %vm1759, %v1745, %v925
        %v1783 = vsel %vm1759, %v1746, %v927
        %v1784 = vsel %vm1759, %v1747, %v929
        %v1785 = vsel %vm1759, %v1748, %v931
        %v1786 = vsel %vm1759, %v1749, %v933
        %v1787 = vsel %vm1759, %v1750, %v935
        %v1788 = vsel %vm1759, %v1751, %v937
        %v1789 = vsel %vm1759, %v1752, %v939
        %v1790 = vsel %vm1759, %v1753, %v941
        %v1791 = vsel %vm1759, %v1754, %v943
        %v1792 = vsel %vm1759, %v1755, %v945
        %v1793 = vsel %vm1759, %v1756, %v947
        %v1794 = vsel %vm1759, %v1757, %v949
        %v1795 = vsel %vm1759, %v1758, %v951
        %vm1796 = vcmask 162816
        %v1797 = vsel %vm1796, %v1760, %v1063
        %v1798 = vsel %vm1796, %v1761, %v1065
        %v1799 = vsel %vm1796, %v1762, %v1067
        %v1800 = vsel %vm1796, %v1763, %v1069
        %v1801 = vsel %vm1796, %v1764, %v1071
        %v1802 = vsel %vm1796, %v1765, %v1073
        %v1803 = vsel %vm1796, %v1766, %v1075
        %v1804 = vsel %vm1796, %v1767, %v1077
        %v1805 = vsel %vm1796, %v1768, %v1079
        %v1806 = vsel %vm1796, %v1769, %v1081
        %v1807 = vsel %vm1796, %v1770, %v1083
        %v1808 = vsel %vm1796, %v1771, %v1085
        %v1809 = vsel %vm1796, %v1772, %v1087
        %v1810 = vsel %vm1796, %v1773, %v1089
        %v1811 = vsel %vm1796, %v1774, %v1091
        %v1812 = vsel %vm1796, %v1775, %v1093
        %v1813 = vsel %vm1796, %v1776, %v1095
        %v1814 = vsel %vm1796, %v1777, %v1097
        %v1815 = vsel %vm1796, %v1778, %v1099
        %v1816 = vsel %vm1796, %v1779, %v1101
        %v1817 = vsel %vm1796, %v1780, %v1103
        %v1818 = vsel %vm1796, %v1781, %v1105
        %v1819 = vsel %vm1796, %v1782, %v1107
        %v1820 = vsel %vm1796, %v1783, %v1109
        %v1821 = vsel %vm1796, %v1784, %v1111
        %v1822 = vsel %vm1796, %v1785, %v1113
        %v1823 = vsel %vm1796, %v1786, %v1115
        %v1824 = vsel %vm1796, %v1787, %v1117
        %v1825 = vsel %vm1796, %v1788, %v1119
        %v1826 = vsel %vm1796, %v1789, %v1121
        %v1827 = vsel %vm1796, %v1790, %v1123
        %v1828 = vsel %vm1796, %v1791, %v1125
        %v1829 = vsel %vm1796, %v1792, %v1127
        %v1830 = vsel %vm1796, %v1793, %v1129
        %v1831 = vsel %vm1796, %v1794, %v1131
        %v1832 = vsel %vm1796, %v1795, %v1133
        %vm1833 = vcmask 195584
        %v1834 = vsel %vm1833, %v1797, %v1177
        %v1835 = vsel %vm1833, %v1798, %v1179
        %v1836 = vsel %vm1833, %v1799, %v1181
        %v1837 = vsel %vm1833, %v1800, %v1183
        %v1838 = vsel %vm1833, %v1801, %v1185
        %v1839 = vsel %vm1833, %v1802, %v1187
        %v1840 = vsel %vm1833, %v1803, %v1189
        %v1841 = vsel %vm1833, %v1804, %v1191
        %v1842 = vsel %vm1833, %v1805, %v1193
        %v1843 = vsel %vm1833, %v1806, %v1195
        %v1844 = vsel %vm1833, %v1807, %v1197
        %v1845 = vsel %vm1833, %v1808, %v1199
        %v1846 = vsel %vm1833, %v1809, %v1201
        %v1847 = vsel %vm1833, %v1810, %v1203
        %v1848 = vsel %vm1833, %v1811, %v1205
        %v1849 = vsel %vm1833, %v1812, %v1207
        %v1850 = vsel %vm1833, %v1813, %v1209
        %v1851 = vsel %vm1833, %v1814, %v1211
        %v1852 = vsel %vm1833, %v1815, %v1213
        %v1853 = vsel %vm1833, %v1816, %v1215
        %v1854 = vsel %vm1833, %v1817, %v1217
        %v1855 = vsel %vm1833, %v1818, %v1219
        %v1856 = vsel %vm1833, %v1819, %v1221
        %v1857 = vsel %vm1833, %v1820, %v1223
        %v1858 = vsel %vm1833, %v1821, %v1225
        %v1859 = vsel %vm1833, %v1822, %v1227
        %v1860 = vsel %vm1833, %v1823, %v1229
        %v1861 = vsel %vm1833, %v1824, %v1231
        %v1862 = vsel %vm1833, %v1825, %v1233
        %v1863 = vsel %vm1833, %v1826, %v1235
        %v1864 = vsel %vm1833, %v1827, %v1237
        %v1865 = vsel %vm1833, %v1828, %v1239
        %v1866 = vsel %vm1833, %v1829, %v1241
        %v1867 = vsel %vm1833, %v1830, %v1243
        %v1868 = vsel %vm1833, %v1831, %v1245
        %v1869 = vsel %vm1833, %v1832, %v1247
        %vm1870 = vcmask 228352
        %v1871 = vsel %vm1870, %v1834, %v1359
        %v1872 = vsel %vm1870, %v1835, %v1361
        %v1873 = vsel %vm1870, %v1836, %v1363
        %v1874 = vsel %vm1870, %v1837, %v1365
        %v1875 = vsel %vm1870, %v1838, %v1367
        %v1876 = vsel %vm1870, %v1839, %v1369
        %v1877 = vsel %vm1870, %v1840, %v1371
        %v1878 = vsel %vm1870, %v1841, %v1373
        %v1879 = vsel %vm1870, %v1842, %v1375
        %v1880 = vsel %vm1870, %v1843, %v1377
        %v1881 = vsel %vm1870, %v1844, %v1379
        %v1882 = vsel %vm1870, %v1845, %v1381
        %v1883 = vsel %vm1870, %v1846, %v1383
        %v1884 = vsel %vm1870, %v1847, %v1385
        %v1885 = vsel %vm1870, %v1848, %v1387
        %v1886 = vsel %vm1870, %v1849, %v1389
        %v1887 = vsel %vm1870, %v1850, %v1391
        %v1888 = vsel %vm1870, %v1851, %v1393
        %v1889 = vsel %vm1870, %v1852, %v1395
        %v1890 = vsel %vm1870, %v1853, %v1397
        %v1891 = vsel %vm1870, %v1854, %v1399
        %v1892 = vsel %vm1870, %v1855, %v1401
        %v1893 = vsel %vm1870, %v1856, %v1403
        %v1894 = vsel %vm1870, %v1857, %v1405
        %v1895 = vsel %vm1870, %v1858, %v1407
        %v1896 = vsel %vm1870, %v1859, %v1409
        %v1897 = vsel %vm1870, %v1860, %v1411
        %v1898 = vsel %vm1870, %v1861, %v1413
        %v1899 = vsel %vm1870, %v1862, %v1415
        %v1900 = vsel %vm1870, %v1863, %v1417
        %v1901 = vsel %vm1870, %v1864, %v1419
        %v1902 = vsel %vm1870, %v1865, %v1421
        %v1903 = vsel %vm1870, %v1866, %v1423
        %v1904 = vsel %vm1870, %v1867, %v1425
        %v1905 = vsel %vm1870, %v1868, %v1427
        %v1906 = vsel %vm1870, %v1869, %v1429
        %vm1907 = vcmask 261120
        %v1908 = vsel %vm1907, %v1871, %v1541
        %v1909 = vsel %vm1907, %v1872, %v1543
        %v1910 = vsel %vm1907, %v1873, %v1545
        %v1911 = vsel %vm1907, %v1874, %v1547
        %v1912 = vsel %vm1907, %v1875, %v1549
        %v1913 = vsel %vm1907, %v1876, %v1551
        %v1914 = vsel %vm1907, %v1877, %v1553
        %v1915 = vsel %vm1907, %v1878, %v1555
        %v1916 = vsel %vm1907, %v1879, %v1557
        %v1917 = vsel %vm1907, %v1880, %v1559
        %v1918 = vsel %vm1907, %v1881, %v1561
        %v1919 = vsel %vm1907, %v1882, %v1563
        %v1920 = vsel %vm1907, %v1883, %v1565
        %v1921 = vsel %vm1907, %v1884, %v1567
        %v1922 = vsel %vm1907, %v1885, %v1569
        %v1923 = vsel %vm1907, %v1886, %v1571
        %v1924 = vsel %vm1907, %v1887, %v1573
        %v1925 = vsel %vm1907, %v1888, %v1575
        %v1926 = vsel %vm1907, %v1889, %v1577
        %v1927 = vsel %vm1907, %v1890, %v1579
        %v1928 = vsel %vm1907, %v1891, %v1581
        %v1929 = vsel %vm1907, %v1892, %v1583
        %v1930 = vsel %vm1907, %v1893, %v1585
        %v1931 = vsel %vm1907, %v1894, %v1587
        %v1932 = vsel %vm1907, %v1895, %v1589
        %v1933 = vsel %vm1907, %v1896, %v1591
        %v1934 = vsel %vm1907, %v1897, %v1593
        %v1935 = vsel %vm1907, %v1898, %v1595
        %v1936 = vsel %vm1907, %v1899, %v1597
        %v1937 = vsel %vm1907, %v1900, %v1599
        %v1938 = vsel %vm1907, %v1901, %v1601
        %v1939 = vsel %vm1907, %v1902, %v1603
        %v1940 = vsel %vm1907, %v1903, %v1605
        %v1941 = vsel %vm1907, %v1904, %v1607
        %v1942 = vsel %vm1907, %v1905, %v1609
        %v1943 = vsel %vm1907, %v1906, %v1611
        %v1944 = vpack.c.bf16 %v1909, %v1908
        %v1945 = vpack.c.bf16 %v1911, %v1910
        %v1946 = vpack.c.bf16 %v1913, %v1912
        %v1947 = vpack.c.bf16 %v1915, %v1914
        %v1948 = vpack.c.bf16 %v1917, %v1916
        %v1949 = vpack.c.bf16 %v1919, %v1918
        %v1950 = vpack.c.bf16 %v1921, %v1920
        %v1951 = vpack.c.bf16 %v1923, %v1922
        %v1952 = vpack.c.bf16 %v1925, %v1924
        %v1953 = vpack.c.bf16 %v1927, %v1926
        %v1954 = vpack.c.bf16 %v1929, %v1928
        %v1955 = vpack.c.bf16 %v1931, %v1930
        %v1956 = vpack.c.bf16 %v1933, %v1932
        %v1957 = vpack.c.bf16 %v1935, %v1934
        %v1958 = vpack.c.bf16 %v1937, %v1936
        %v1959 = vpack.c.bf16 %v1939, %v1938
        %v1960 = vpack.c.bf16 %v1941, %v1940
        %v1961 = vpack.c.bf16 %v1943, %v1942
        %v1962 = vld [vmem:[%s1] sm:$0xf]
        %v1963 = vld [vmem:[%s1 + $0x4] sm:$0xf]
        %v1964 = vld [vmem:[%s1 + $0x8] sm:$0xf]
        %v1965 = vld [vmem:[%s1 + $0xc] sm:$0xf]
        %v1966 = vld [vmem:[%s1 + $0x10] sm:$0x3]
        %v1967 = vld [vmem:[%s2] sm:$0x1]
        %v1969 = vperm.slane %v1967, 0
        %v1976 = vunpack.c.l.b16 %v1962
        %v1977 = vunpack.c.l.b16 %v1963
        %v1978 = vunpack.c.l.b16 %v1964
        %v1979 = vunpack.c.l.b16 %v1965
        %v1980 = vunpack.c.l.b16 %v1966
        %v1981 = vpack.c.b16 %v1977, %v1976
        %v1982 = vpack.c.b16 %v1979, %v1978
        %v1983 = vpack.c.b16 %v1980, %v1980
        %vm1986 = vcmask 293888
        %v1988 = vsel %vm1986, %v1944, 0
        %v1991 = vsel %vm1986, %v1945, 0
        %v1994 = vsel %vm1986, %v1946, 0
        %v1997 = vsel %vm1986, %v1947, 0
        %v2000 = vsel %vm1986, %v1948, 0
        %v2003 = vsel %vm1986, %v1949, 0
        %v2006 = vsel %vm1986, %v1950, 0
        %v2009 = vsel %vm1986, %v1951, 0
        %v2012 = vsel %vm1986, %v1952, 0
        %v2015 = vsel %vm1986, %v1953, 0
        %v2018 = vsel %vm1986, %v1954, 0
        %v2021 = vsel %vm1986, %v1955, 0
        %v2024 = vsel %vm1986, %v1956, 0
        %v2027 = vsel %vm1986, %v1957, 0
        %v2030 = vsel %vm1986, %v1958, 0
        %v2033 = vsel %vm1986, %v1959, 0
        %v2036 = vsel %vm1986, %v1960, 0
        %v2039 = vsel %vm1986, %v1961, 0
        %v2042 = vsel %vm1466, %v1983, 0
        %2044 = vmatpush.bf16.msra.mxu0 0
        %2045 = vmatpush.bf16.msra.mxu0 0
        %2046 = vmatpush.bf16.msra.mxu0 0
        %2047 = vmatpush.bf16.msra.mxu0 0
        %2048 = vmatpush.bf16.msra.mxu0 0
        %2049 = vmatpush.bf16.msra.mxu0 %v2042
        %2050 = vmatpush.bf16.msra.mxu0 %v1982
        %2051 = vmatpush.bf16.msra.mxu0 %v1981
        %2052 = vmatmul.bf16.gmra.mxu0 %v1988
        %v2053 = vpop.f32.mrf.mxu0
        %v2054 = vadd.f32 %v1969, %v2053
        %v2055 = vpop.f32.mrf.mxu0
        %v2056 = vadd.f32 %v1969, %v2055
        %2057 = vmatmul.bf16.gmra.mxu0 %v1991
        %v2058 = vpop.f32.mrf.mxu0
        %v2059 = vadd.f32 %v1969, %v2058
        %v2060 = vpop.f32.mrf.mxu0
        %v2061 = vadd.f32 %v1969, %v2060
        %2062 = vmatmul.bf16.gmra.mxu0 %v1994
        %v2063 = vpop.f32.mrf.mxu0
        %v2064 = vadd.f32 %v1969, %v2063
        %v2065 = vpop.f32.mrf.mxu0
        %v2066 = vadd.f32 %v1969, %v2065
        %2067 = vmatmul.bf16.gmra.mxu0 %v1997
        %v2068 = vpop.f32.mrf.mxu0
        %v2069 = vadd.f32 %v1969, %v2068
        %v2070 = vpop.f32.mrf.mxu0
        %v2071 = vadd.f32 %v1969, %v2070
        %2072 = vmatmul.bf16.gmra.mxu0 %v2000
        %v2073 = vpop.f32.mrf.mxu0
        %v2074 = vadd.f32 %v1969, %v2073
        %v2075 = vpop.f32.mrf.mxu0
        %v2076 = vadd.f32 %v1969, %v2075
        %2077 = vmatmul.bf16.gmra.mxu0 %v2003
        %v2078 = vpop.f32.mrf.mxu0
        %v2079 = vadd.f32 %v1969, %v2078
        %v2080 = vpop.f32.mrf.mxu0
        %v2081 = vadd.f32 %v1969, %v2080
        %2082 = vmatmul.bf16.gmra.mxu0 %v2006
        %v2083 = vpop.f32.mrf.mxu0
        %v2084 = vadd.f32 %v1969, %v2083
        %v2085 = vpop.f32.mrf.mxu0
        %v2086 = vadd.f32 %v1969, %v2085
        %2087 = vmatmul.bf16.gmra.mxu0 %v2009
        %v2088 = vpop.f32.mrf.mxu0
        %v2089 = vadd.f32 %v1969, %v2088
        %v2090 = vpop.f32.mrf.mxu0
        %v2091 = vadd.f32 %v1969, %v2090
        %2092 = vmatmul.bf16.gmra.mxu0 %v2012
        %v2093 = vpop.f32.mrf.mxu0
        %v2094 = vadd.f32 %v1969, %v2093
        %v2095 = vpop.f32.mrf.mxu0
        %v2096 = vadd.f32 %v1969, %v2095
        %2097 = vmatmul.bf16.gmra.mxu0 %v2015
        %v2098 = vpop.f32.mrf.mxu0
        %v2099 = vadd.f32 %v1969, %v2098
        %v2100 = vpop.f32.mrf.mxu0
        %v2101 = vadd.f32 %v1969, %v2100
        %2102 = vmatmul.bf16.gmra.mxu0 %v2018
        %v2103 = vpop.f32.mrf.mxu0
        %v2104 = vadd.f32 %v1969, %v2103
        %v2105 = vpop.f32.mrf.mxu0
        %v2106 = vadd.f32 %v1969, %v2105
        %2107 = vmatmul.bf16.gmra.mxu0 %v2021
        %v2108 = vpop.f32.mrf.mxu0
        %v2109 = vadd.f32 %v1969, %v2108
        %v2110 = vpop.f32.mrf.mxu0
        %v2111 = vadd.f32 %v1969, %v2110
        %2112 = vmatmul.bf16.gmra.mxu0 %v2024
        %v2113 = vpop.f32.mrf.mxu0
        %v2114 = vadd.f32 %v1969, %v2113
        %v2115 = vpop.f32.mrf.mxu0
        %v2116 = vadd.f32 %v1969, %v2115
        %2117 = vmatmul.bf16.gmra.mxu0 %v2027
        %v2118 = vpop.f32.mrf.mxu0
        %v2119 = vadd.f32 %v1969, %v2118
        %v2120 = vpop.f32.mrf.mxu0
        %v2121 = vadd.f32 %v1969, %v2120
        %2122 = vmatmul.bf16.gmra.mxu0 %v2030
        %v2123 = vpop.f32.mrf.mxu0
        %v2124 = vadd.f32 %v1969, %v2123
        %v2125 = vpop.f32.mrf.mxu0
        %v2126 = vadd.f32 %v1969, %v2125
        %2127 = vmatmul.bf16.gmra.mxu0 %v2033
        %v2128 = vpop.f32.mrf.mxu0
        %v2129 = vadd.f32 %v1969, %v2128
        %v2130 = vpop.f32.mrf.mxu0
        %v2131 = vadd.f32 %v1969, %v2130
        %2132 = vmatmul.bf16.gmra.mxu0 %v2036
        %v2133 = vpop.f32.mrf.mxu0
        %v2134 = vadd.f32 %v1969, %v2133
        %v2135 = vpop.f32.mrf.mxu0
        %v2136 = vadd.f32 %v1969, %v2135
        %2137 = vmatmul.bf16.gmra.mxu0 %v2039
        %v2138 = vpop.f32.mrf.mxu0
        %v2139 = vadd.f32 %v1969, %v2138
        %v2140 = vpop.f32.mrf.mxu0
        %v2141 = vadd.f32 %v1969, %v2140
        %2142 = vdwg.mxu0
        %v2143 = vmax.f32 %v2054, 0.0
        %v2144 = vmax.f32 %v2056, 0.0
        %v2145 = vmax.f32 %v2059, 0.0
        %v2146 = vmax.f32 %v2061, 0.0
        %v2147 = vmax.f32 %v2064, 0.0
        %v2148 = vmax.f32 %v2066, 0.0
        %v2149 = vmax.f32 %v2069, 0.0
        %v2150 = vmax.f32 %v2071, 0.0
        %v2151 = vmax.f32 %v2074, 0.0
        %v2152 = vmax.f32 %v2076, 0.0
        %v2153 = vmax.f32 %v2079, 0.0
        %v2154 = vmax.f32 %v2081, 0.0
        %v2155 = vmax.f32 %v2084, 0.0
        %v2156 = vmax.f32 %v2086, 0.0
        %v2157 = vmax.f32 %v2089, 0.0
        %v2158 = vmax.f32 %v2091, 0.0
        %v2159 = vmax.f32 %v2094, 0.0
        %v2160 = vmax.f32 %v2096, 0.0
        %v2161 = vmax.f32 %v2099, 0.0
        %v2162 = vmax.f32 %v2101, 0.0
        %v2163 = vmax.f32 %v2104, 0.0
        %v2164 = vmax.f32 %v2106, 0.0
        %v2165 = vmax.f32 %v2109, 0.0
        %v2166 = vmax.f32 %v2111, 0.0
        %v2167 = vmax.f32 %v2114, 0.0
        %v2168 = vmax.f32 %v2116, 0.0
        %v2169 = vmax.f32 %v2119, 0.0
        %v2170 = vmax.f32 %v2121, 0.0
        %v2171 = vmax.f32 %v2124, 0.0
        %v2172 = vmax.f32 %v2126, 0.0
        %v2173 = vmax.f32 %v2129, 0.0
        %v2174 = vmax.f32 %v2131, 0.0
        %v2175 = vmax.f32 %v2134, 0.0
        %v2176 = vmax.f32 %v2136, 0.0
        %v2177 = vmax.f32 %v2139, 0.0
        %v2178 = vmax.f32 %v2141, 0.0
        %v2179 = vld [vmem:[%s3] sm:$0x7]
        %v2181 = vperm.slane %v2179, 0
        %v2182 = vperm.slane %v2179, 1
        %v2183 = vperm.slane %v2179, 2
        %v2186 = vsel %vm1907, %v2183, 0
        %2188 = vmatpush.msra.mxu0 %v2158
        %2189 = vmatpush.msra.mxu0 %v2157
        %2190 = vmatpush.msra.mxu0 %v2156
        %2191 = vmatpush.msra.mxu0 %v2155
        %2192 = vmatpush.msra.mxu0 %v2154
        %2193 = vmatpush.msra.mxu0 %v2153
        %2194 = vmatpush.msra.mxu0 %v2152
        %2195 = vmatpush.msra.mxu0 %v2151
        %2196 = vmatpush.msra.mxu0 %v2150
        %2197 = vmatpush.msra.mxu0 %v2149
        %2198 = vmatpush.msra.mxu0 %v2148
        %2199 = vmatpush.msra.mxu0 %v2147
        %2200 = vmatpush.msra.mxu0 %v2146
        %2201 = vmatpush.msra.mxu0 %v2145
        %2202 = vmatpush.msra.mxu0 %v2144
        %2203 = vmatpush.msra.mxu0 %v2143
        %2204 = vmatmul.f32.gmra.mxu0 %v2181
        %v2205 = vpop.f32.mrf.mxu0
        %v2206 = vadd.f32 0.0, %v2205
        %2207 = vdwg.mxu0
        %2208 = vmatpush.msra.mxu0 %v2174
        %2209 = vmatpush.msra.mxu0 %v2173
        %2210 = vmatpush.msra.mxu0 %v2172
        %2211 = vmatpush.msra.mxu0 %v2171
        %2212 = vmatpush.msra.mxu0 %v2170
        %2213 = vmatpush.msra.mxu0 %v2169
        %2214 = vmatpush.msra.mxu0 %v2168
        %2215 = vmatpush.msra.mxu0 %v2167
        %2216 = vmatpush.msra.mxu0 %v2166
        %2217 = vmatpush.msra.mxu0 %v2165
        %2218 = vmatpush.msra.mxu0 %v2164
        %2219 = vmatpush.msra.mxu0 %v2163
        %2220 = vmatpush.msra.mxu0 %v2162
        %2221 = vmatpush.msra.mxu0 %v2161
        %2222 = vmatpush.msra.mxu0 %v2160
        %2223 = vmatpush.msra.mxu0 %v2159
        %2224 = vmatmul.f32.gmra.mxu0 %v2182
        %v2225 = vpop.f32.mrf.mxu0
        %v2226 = vadd.f32 %v2206, %v2225
        %2227 = vdwg.mxu0
        %2228 = vmatpush.msra.mxu0 0.0
        %2229 = vmatpush.msra.mxu0 0.0
        %2230 = vmatpush.msra.mxu0 0.0
        %2231 = vmatpush.msra.mxu0 0.0
        %2232 = vmatpush.msra.mxu0 0.0
        %2233 = vmatpush.msra.mxu0 0.0
        %2234 = vmatpush.msra.mxu0 0.0
        %2235 = vmatpush.msra.mxu0 0.0
        %2236 = vmatpush.msra.mxu0 0.0
        %2237 = vmatpush.msra.mxu0 0.0
        %2238 = vmatpush.msra.mxu0 0.0
        %2239 = vmatpush.msra.mxu0 0.0
        %2240 = vmatpush.msra.mxu0 %v2178
        %2241 = vmatpush.msra.mxu0 %v2177
        %2242 = vmatpush.msra.mxu0 %v2176
        %2243 = vmatpush.msra.mxu0 %v2175
        %2244 = vmatmul.f32.gmra.mxu0 %v2186
        %v2245 = vpop.f32.mrf.mxu0
        %v2246 = vadd.f32 %v2226, %v2245
        %2247 = vdwg.mxu0
        %v2248 = vld [vmem:[%s4] sm:$0xff]
        %v2249 = vld [vmem:[%s4 + $0x8] sm:$0xff]
        %v2250 = vld [vmem:[%s4 + $0x10] sm:$0xff]
        %v2251 = vld [vmem:[%s4 + $0x18] sm:$0xff]
        %v2252 = vld [vmem:[%s4 + $0x20] sm:$0xff]
        %v2253 = vld [vmem:[%s4 + $0x28] sm:$0xff]
        %v2254 = vld [vmem:[%s4 + $0x30] sm:$0xff]
        %v2255 = vld [vmem:[%s4 + $0x38] sm:$0xff]
        %v2256 = vld [vmem:[%s4 + $0x40] sm:$0xff]
        %v2257 = vld [vmem:[%s4 + $0x48] sm:$0xff]
        %v2258 = vld [vmem:[%s4 + $0x50] sm:$0xff]
        %v2259 = vld [vmem:[%s4 + $0x58] sm:$0xff]
        %v2260 = vld [vmem:[%s4 + $0x60] sm:$0xff]
        %v2261 = vld [vmem:[%s4 + $0x68] sm:$0xff]
        %v2262 = vld [vmem:[%s4 + $0x70] sm:$0xff]
        %v2263 = vld [vmem:[%s4 + $0x78] sm:$0xff]
        %v2264 = vld [vmem:[%s5] sm:$0x1]
        %2265 = vmatpush.msra.mxu0 %v2263
        %2266 = vmatpush.msra.mxu0 %v2262
        %2267 = vmatpush.msra.mxu0 %v2261
        %2268 = vmatpush.msra.mxu0 %v2260
        %2269 = vmatpush.msra.mxu0 %v2259
        %2270 = vmatpush.msra.mxu0 %v2258
        %2271 = vmatpush.msra.mxu0 %v2257
        %2272 = vmatpush.msra.mxu0 %v2256
        %2273 = vmatpush.msra.mxu0 %v2255
        %2274 = vmatpush.msra.mxu0 %v2254
        %2275 = vmatpush.msra.mxu0 %v2253
        %2276 = vmatpush.msra.mxu0 %v2252
        %2277 = vmatpush.msra.mxu0 %v2251
        %2278 = vmatpush.msra.mxu0 %v2250
        %2279 = vmatpush.msra.mxu0 %v2249
        %2280 = vmatpush.msra.mxu0 %v2248
        %2281 = vmatmul.f32.gmra.mxu0 %v2246
        %v2282 = vpop.f32.mrf.mxu0
        %v2283 = vadd.f32 %v2264, %v2282
        %2284 = vdwg.mxu0
        %2285 = vst [vmem:[%s243] sm:$0x1] %v2283
        %s2286 = sand.u32 %s159, 1
        %s2287 = scalar_lea.sflag [#allocation3], %s2286
        %s2288 = sand.u32 %s159, 1
        %s2289 = scalar_lea.vmem [#allocation2], %s2288
        // Predicated region
        $region45: #{network_forward.1} parent=43 // pred_check
          %p2290 = pneg %p169
        $region46: #{network_forward.1} parent=43 // pred_check_branch
          %2292 = sbr.rel (%p2290) target = $region48
        $region47: #{network_forward.1} parent=43 // pred_region
          %2294 = vsyncadd %s2287, 0
          %s2295 = scalar_lea.hbm %s6, %s20
          %s2297 = sshll.u32 %s2289, 4
          %s2298 = int_to_ptr.vmem [resolvable:$true] %s2297
          %s2299 = sshll.u32 %s2295, 4
          %s2300 = int_to_ptr.hbm [resolvable:$true] %s2299
          %2302 = dma.vmem_to_hbm [thread:$0]  %s2298, 16, %s2300, %s2287
        $region48: #{network_forward.1} parent=43 // pred_fallthru
          _
      $region44: #{network_forward.1} parent=5 // pred_fallthru
        _
      %p2303 = scmp.le.s32.totalorder 2, %s15
      // Predicated region
      $region49: #{network_forward.1} parent=5 // pred_check
        %p2304 = pneg %p2303
      $region50: #{network_forward.1} parent=5 // pred_check_branch
        %2306 = sbr.rel (%p2304) target = $region52
      $region51: #{network_forward.1} parent=5 // pred_region
        %s2307 = ssub.s32 %s15, 2
        // Predicated region
        $region53: #{network_forward.1} parent=51 // pred_check
          %p2308 = pneg %p175
        $region54: #{network_forward.1} parent=51 // pred_check_branch
          %2310 = sbr.rel (%p2308) target = $region56
        $region55: #{network_forward.1} parent=51 // pred_region
          %s2311 = sand.u32 %s160, 1
          %s2312 = scalar_lea.sflag [#allocation3], %s2311
          %s2313 = sand.u32 %s160, 1
          %s2314 = scalar_lea.vmem [#allocation2], %s2313
          %2316 = dma.done %s2312, 16
        $region56: #{network_forward.1} parent=51 // pred_fallthru
          _
      $region52: #{network_forward.1} parent=5 // pred_fallthru
        _
    $region6: #{network_forward.1} parent=1 // loop_footer
      %s19 = sadd.s32 1, %s15
    $region7: #{network_forward.1} parent=1 // loop_footer_branch
      %14 = sbr.rel target = $region3
    $region8: #{network_forward.1} parent=1 // loop_exit
      _
    %2317 = vsyncpa [#allocation3], 1
    %s2318 = scalar_lea.sflag [#allocation3], 1
    %2319 = vsyncpa %s2318, 1

</llo_original>
